<compile_context>
chip_gen: v7x
topology: tpu7x:2x2x1
jax: 0.10.0
libtpu: 0.0.40
codegen_flags: <defaults>
</compile_context>

<pallas_src>
import jax
import jax.numpy as jnp
from jax.experimental import pallas as pl
from jax.experimental.pallas import tpu as pltpu


def _make_fused_lstm_kernel(num_layers, hidden_size, batch, seq_len, eps=1e-5):
    H = hidden_size
    G = 4 * H
    B = batch
    T = seq_len
    n_in = 1 + 3 * num_layers + 4  # x, per-layer (w_ih, w_hh, b), gamma, beta, wfc, bfc

    def kernel(*refs):
        # refs layout:
        #   [0]              x_ref    (T*B, I)  bf16, time-major rows (t*B + b)
        #   [1 + 3l + 0]     w_ref    (in_l, 4H) bf16  W_ih_l^T (g-cols pre-scaled x2)
        #   [1 + 3l + 1]     u_ref    (H, 4H)    bf16  W_hh_l^T (g-cols pre-scaled x2)
        #   [1 + 3l + 2]     b_ref    (1, 4H)    f32   b_ih+b_hh (g-cols pre-scaled x2)
        #   [n_in-4 .. n_in) gamma, beta (1,H) / wfc (H,O) / bfc (1,O)   f32
        #   [n_in]           out_ref  (B, O)
        #   [n_in+1]         xbuf_ref (T*B, H)   bf16  inter-layer scratch (VMEM)
        x_ref = refs[0]
        layer_refs = refs[1:1 + 3 * num_layers]
        gamma_ref, beta_ref, wfc_ref, bfc_ref = refs[1 + 3 * num_layers:n_in]
        out_ref = refs[n_in]
        xbuf_ref = refs[n_in + 1]

        h = None
        for layer in range(num_layers):
            w_t = layer_refs[3 * layer][...]        # (in, 4H) bf16, hoisted load
            u_t = layer_refs[3 * layer + 1][...]    # (H, 4H)  bf16, hoisted load
            b = layer_refs[3 * layer + 2][...]      # (1, 4H)  f32,  hoisted load

            # Layer input, time-major (T*B, in), bf16.
            x_tb = x_ref[...] if layer == 0 else xbuf_ref[...]

            # Input->gates for ALL timesteps in one bf16 MXU pass, f32 accumulate
            # (off the serial recurrence).
            xg = jnp.dot(x_tb, w_t, preferred_element_type=jnp.float32) + b  # (T*B, 4H) f32

            h = jnp.zeros((B, H), jnp.float32)
            c = jnp.zeros((B, H), jnp.float32)
            # T is small & static: full unroll; only the (B,H)x(H,4H) bf16
            # recurrent matmul sits on the critical path.
            for t in range(T):
                gates = xg[t * B:(t + 1) * B, :] + jnp.dot(
                    h.astype(jnp.bfloat16), u_t,
                    preferred_element_type=jnp.float32)                      # (B, 4H) f32
                # Single EUP sigmoid over the full 4H-lane vreg; g-gate columns
                # were pre-scaled by 2, so tanh(z) = 2*sigmoid(2z) - 1.
                sig = jax.nn.sigmoid(gates)
                i_g = sig[:, 0 * H:1 * H]
                f_g = sig[:, 1 * H:2 * H]
                g_g = 2.0 * sig[:, 2 * H:3 * H] - 1.0
                o_g = sig[:, 3 * H:4 * H]
                c = f_g * c + i_g * g_g
                h = o_g * jnp.tanh(c)
                if layer + 1 < num_layers:
                    # Next layer's input stays in VMEM scratch (no stack/relayout).
                    xbuf_ref[t * B:(t + 1) * B, :] = h.astype(jnp.bfloat16)
            # TODO(synk): inter-layer dropout (p=0.3) is train-only; no-op in eval.

        # ---- fused head: LayerNorm(last-step hidden) -> Linear (f32, off the
        # critical path; negligible cost, kept f32 for output accuracy) ----
        h_last = h                                   # (B, H)
        mean = jnp.mean(h_last, axis=-1, keepdims=True)
        var = jnp.mean((h_last - mean) ** 2, axis=-1, keepdims=True)
        normed = (h_last - mean) * jax.lax.rsqrt(var + eps)
        y = normed * gamma_ref[...] + beta_ref[...]
        out_ref[...] = (
            jnp.dot(y, wfc_ref[...], preferred_element_type=jnp.float32)
            + bfc_ref[...]
        ).astype(out_ref.dtype)

    return kernel


@jax.jit
def lstm_model_forward(params, x_bti):
    """x_bti: (B, T, input_size), batch_first — same layout as the PyTorch module."""
    B, T, I = x_bti.shape
    layers = params["layers"]
    num_layers = len(layers)
    H = layers[0]["w_hh_t"].shape[0]
    O = params["w_fc_t"].shape[1]

    # Time-major, flattened input: row index = t*B + b (removes per-step
    # sublane gather inside the kernel). bf16 for the MXU.
    x_tb = jnp.transpose(x_bti, (1, 0, 2)).reshape(T * B, I).astype(jnp.bfloat16)

    # Pre-scale the g-gate columns by 2 so the kernel recovers tanh from the
    # single sigmoid pass: tanh(z) = 2*sigmoid(2z) - 1.
    g_scale = jnp.concatenate([
        jnp.ones((2 * H,), jnp.float32),
        jnp.full((H,), 2.0, jnp.float32),
        jnp.ones((H,), jnp.float32),
    ])

    operands = [x_tb]
    for lp in layers:
        operands += [
            (lp["w_ih_t"] * g_scale).astype(jnp.bfloat16),   # (in, 4H)
            (lp["w_hh_t"] * g_scale).astype(jnp.bfloat16),   # (H, 4H)
            (lp["bias"] * g_scale).reshape(1, 4 * H),        # (1, 4H) f32
        ]
    operands += [
        params["ln_gamma"].reshape(1, H),
        params["ln_beta"].reshape(1, H),
        params["w_fc_t"],                                    # (H, O) f32
        params["b_fc"].reshape(1, O),
    ]

    vmem = pl.BlockSpec(memory_space=pltpu.MemorySpace.VMEM)
    return pl.pallas_call(
        _make_fused_lstm_kernel(num_layers, H, B, T),
        out_shape=jax.ShapeDtypeStruct((B, O), jnp.float32),
        in_specs=[vmem] * len(operands),
        out_specs=vmem,
        scratch_shapes=[pltpu.VMEM((T * B, H), jnp.bfloat16)],
    )(*operands)


def lstm_model_reference(params, x_bti, eps=1e-5):
    """Pure-JAX f32 reference (PyTorch eval-mode semantics)."""
    B, T, _ = x_bti.shape
    x = x_bti.astype(jnp.float32)
    for lp in params["layers"]:
        H = lp["w_hh_t"].shape[0]
        h = jnp.zeros((B, H), jnp.float32)
        c = jnp.zeros((B, H), jnp.float32)
        outs = []
        for t in range(T):
            gates = x[:, t, :] @ lp["w_ih_t"] + h @ lp["w_hh_t"] + lp["bias"]
            i = jax.nn.sigmoid(gates[:, 0 * H:1 * H])
            f = jax.nn.sigmoid(gates[:, 1 * H:2 * H])
            g = jnp.tanh(gates[:, 2 * H:3 * H])
            o = jax.nn.sigmoid(gates[:, 3 * H:4 * H])
            c = f * c + i * g
            h = o * jnp.tanh(c)
            outs.append(h)
        x = jnp.stack(outs, axis=1)
    h_last = x[:, -1, :]
    mean = h_last.mean(-1, keepdims=True)
    var = ((h_last - mean) ** 2).mean(-1, keepdims=True)
    y = (h_last - mean) * jax.lax.rsqrt(var + eps) * params["ln_gamma"] + params["ln_beta"]
    return y @ params["w_fc_t"] + params["b_fc"]


def init_params(key, input_size, hidden_size, num_layers, output_size):
    """Deterministic init mimicking PyTorch's U(-1/sqrt(H), 1/sqrt(H))."""
    params = {"layers": []}
    k = 1.0 / jnp.sqrt(jnp.float32(hidden_size))
    for layer in range(num_layers):
        in_sz = input_size if layer == 0 else hidden_size
        key, k1, k2, k3, k4 = jax.random.split(key, 5)
        w_ih = jax.random.uniform(k1, (4 * hidden_size, in_sz), jnp.float32, -k, k)
        w_hh = jax.random.uniform(k2, (4 * hidden_size, hidden_size), jnp.float32, -k, k)
        b_ih = jax.random.uniform(k3, (4 * hidden_size,), jnp.float32, -k, k)
        b_hh = jax.random.uniform(k4, (4 * hidden_size,), jnp.float32, -k, k)
        params["layers"].append({
            "w_ih_t": w_ih.T,                 # (in, 4H)
            "w_hh_t": w_hh.T,                 # (H, 4H)
            "bias": b_ih + b_hh,              # (4H,)
        })
    params["ln_gamma"] = jnp.ones((hidden_size,), jnp.float32)
    params["ln_beta"] = jnp.zeros((hidden_size,), jnp.float32)
    kf = 1.0 / jnp.sqrt(jnp.float32(hidden_size))
    key, k5, k6 = jax.random.split(key, 3)
    w_fc = jax.random.uniform(k5, (output_size, hidden_size), jnp.float32, -kf, kf)
    b_fc = jax.random.uniform(k6, (output_size,), jnp.float32, -kf, kf)
    params["w_fc_t"] = w_fc.T                 # (H, O)
    params["b_fc"] = b_fc
    return params


if __name__ == "__main__":
    input_size, hidden_size, num_layers, output_size = 16, 32, 2, 4
    batch, seq = 2, 8

    key = jax.random.PRNGKey(0)
    key, kp, kx = jax.random.split(key, 3)
    params = init_params(kp, input_size, hidden_size, num_layers, output_size)
    x = jax.random.normal(kx, (batch, seq, input_size), jnp.float32)

    out = lstm_model_forward(params, x)
    jax.block_until_ready(out)
    assert out.shape == (batch, output_size)
    assert bool(jnp.all(jnp.isfinite(out)))

    # Loose tolerance: bf16 matmul operands (f32 accumulation) intentionally
    # relax bitwise parity with the f32 reference.
    ref = lstm_model_reference(params, x)
    assert float(jnp.max(jnp.abs(out - ref))) < 1e-1

    print("KERNEL_OK")
</pallas_src>

<mosaic_0001>
module attributes {stable_mosaic.version = 11 : i64} {
  func.func @kernel(%arg0: memref<16x16xbf16, #tpu.memory_space<vmem>>, %arg1: memref<16x128xbf16, #tpu.memory_space<vmem>>, %arg2: memref<32x128xbf16, #tpu.memory_space<vmem>>, %arg3: memref<1x128xf32, #tpu.memory_space<vmem>>, %arg4: memref<32x128xbf16, #tpu.memory_space<vmem>>, %arg5: memref<32x128xbf16, #tpu.memory_space<vmem>>, %arg6: memref<1x128xf32, #tpu.memory_space<vmem>>, %arg7: memref<1x32xf32, #tpu.memory_space<vmem>>, %arg8: memref<1x32xf32, #tpu.memory_space<vmem>>, %arg9: memref<32x4xf32, #tpu.memory_space<vmem>>, %arg10: memref<1x4xf32, #tpu.memory_space<vmem>>, %arg11: memref<2x4xf32, #tpu.memory_space<vmem>>, %arg12: memref<16x32xbf16, #tpu.memory_space<vmem>>) attributes {dimension_semantics = [], scalar_prefetch = 0 : i64, scratch_operands = 1 : i64, tpu.core_type = #tpu.core_type<tc>} {
    %c0 = arith.constant 0 : index
    %c0_0 = arith.constant 0 : index
    %0 = vector.load %arg1[%c0, %c0_0] : memref<16x128xbf16, #tpu.memory_space<vmem>>, vector<16x128xbf16>
    %c0_1 = arith.constant 0 : index
    %c0_2 = arith.constant 0 : index
    %1 = vector.load %arg2[%c0_1, %c0_2] : memref<32x128xbf16, #tpu.memory_space<vmem>>, vector<32x128xbf16>
    %c0_3 = arith.constant 0 : index
    %c0_4 = arith.constant 0 : index
    %2 = vector.load %arg3[%c0_3, %c0_4] : memref<1x128xf32, #tpu.memory_space<vmem>>, vector<1x128xf32>
    %c0_5 = arith.constant 0 : index
    %c0_6 = arith.constant 0 : index
    %3 = vector.load %arg0[%c0_5, %c0_6] : memref<16x16xbf16, #tpu.memory_space<vmem>>, vector<16x16xbf16>
    %cst = arith.constant dense<0.000000e+00> : vector<16x128xf32>
    %4 = tpu.matmul %3, %0, %cst {dimension_numbers = #tpu.dot_dimension_numbers<[1], [0], [0], [1], [0, 0, 1, 1], [], []>} : vector<16x16xbf16>, vector<16x128xbf16>, vector<16x128xf32> -> vector<16x128xf32>
    %5 = vector.broadcast %2 : vector<1x128xf32> to vector<16x128xf32>
    %6 = arith.addf %4, %5 : vector<16x128xf32>
    %cst_7 = arith.constant 0.000000e+00 : f32
    %7 = vector.broadcast %cst_7 : f32 to vector<2x32xf32>
    %cst_8 = arith.constant 0.000000e+00 : f32
    %8 = vector.broadcast %cst_8 : f32 to vector<2x32xf32>
    %9 = vector.extract_strided_slice %6 {offsets = [0, 0], sizes = [2, 128], strides = [1, 1]} : vector<16x128xf32> to vector<2x128xf32>
    %10 = arith.truncf %7 : vector<2x32xf32> to vector<2x32xbf16>
    %cst_9 = arith.constant dense<0.000000e+00> : vector<2x128xf32>
    %11 = tpu.matmul %10, %1, %cst_9 {dimension_numbers = #tpu.dot_dimension_numbers<[1], [0], [0], [1], [0, 0, 1, 1], [], []>} : vector<2x32xbf16>, vector<32x128xbf16>, vector<2x128xf32> -> vector<2x128xf32>
    %12 = arith.addf %9, %11 : vector<2x128xf32>
    %13 = arith.negf %12 : vector<2x128xf32>
    %14 = math.exp %13 : vector<2x128xf32>
    %cst_10 = arith.constant 1.000000e+00 : f32
    %15 = vector.broadcast %cst_10 : f32 to vector<2x128xf32>
    %16 = arith.addf %15, %14 : vector<2x128xf32>
    %17 = arith.divf %15, %16 : vector<2x128xf32>
    %18 = vector.extract_strided_slice %17 {offsets = [0, 0], sizes = [2, 32], strides = [1, 1]} : vector<2x128xf32> to vector<2x32xf32>
    %19 = vector.extract_strided_slice %17 {offsets = [0, 32], sizes = [2, 32], strides = [1, 1]} : vector<2x128xf32> to vector<2x32xf32>
    %20 = vector.extract_strided_slice %17 {offsets = [0, 64], sizes = [2, 32], strides = [1, 1]} : vector<2x128xf32> to vector<2x32xf32>
    %cst_11 = arith.constant 2.000000e+00 : f32
    %21 = vector.broadcast %cst_11 : f32 to vector<2x32xf32>
    %22 = arith.mulf %21, %20 : vector<2x32xf32>
    %cst_12 = arith.constant 1.000000e+00 : f32
    %23 = vector.broadcast %cst_12 : f32 to vector<2x32xf32>
    %24 = arith.subf %22, %23 : vector<2x32xf32>
    %25 = vector.extract_strided_slice %17 {offsets = [0, 96], sizes = [2, 32], strides = [1, 1]} : vector<2x128xf32> to vector<2x32xf32>
    %26 = arith.mulf %19, %8 : vector<2x32xf32>
    %27 = arith.mulf %18, %24 : vector<2x32xf32>
    %28 = arith.addf %26, %27 : vector<2x32xf32>
    %29 = math.tanh %28 : vector<2x32xf32>
    %30 = arith.mulf %25, %29 : vector<2x32xf32>
    %31 = arith.truncf %30 : vector<2x32xf32> to vector<2x32xbf16>
    %c0_13 = arith.constant 0 : index
    %c0_14 = arith.constant 0 : index
    %32 = vector.load %arg12[%c0_13, %c0_14] : memref<16x32xbf16, #tpu.memory_space<vmem>>, vector<2x32xbf16>
    tpu.vector_store %arg12[%c0_13, %c0_14], %31 {strides = array<i32>} : memref<16x32xbf16, #tpu.memory_space<vmem>>, vector<2x32xbf16>,
    %33 = vector.extract_strided_slice %6 {offsets = [2, 0], sizes = [2, 128], strides = [1, 1]} : vector<16x128xf32> to vector<2x128xf32>
    %34 = arith.truncf %30 : vector<2x32xf32> to vector<2x32xbf16>
    %cst_15 = arith.constant dense<0.000000e+00> : vector<2x128xf32>
    %35 = tpu.matmul %34, %1, %cst_15 {dimension_numbers = #tpu.dot_dimension_numbers<[1], [0], [0], [1], [0, 0, 1, 1], [], []>} : vector<2x32xbf16>, vector<32x128xbf16>, vector<2x128xf32> -> vector<2x128xf32>
    %36 = arith.addf %33, %35 : vector<2x128xf32>
    %37 = arith.negf %36 : vector<2x128xf32>
    %38 = math.exp %37 : vector<2x128xf32>
    %cst_16 = arith.constant 1.000000e+00 : f32
    %39 = vector.broadcast %cst_16 : f32 to vector<2x128xf32>
    %40 = arith.addf %39, %38 : vector<2x128xf32>
    %41 = arith.divf %39, %40 : vector<2x128xf32>
    %42 = vector.extract_strided_slice %41 {offsets = [0, 0], sizes = [2, 32], strides = [1, 1]} : vector<2x128xf32> to vector<2x32xf32>
    %43 = vector.extract_strided_slice %41 {offsets = [0, 32], sizes = [2, 32], strides = [1, 1]} : vector<2x128xf32> to vector<2x32xf32>
    %44 = vector.extract_strided_slice %41 {offsets = [0, 64], sizes = [2, 32], strides = [1, 1]} : vector<2x128xf32> to vector<2x32xf32>
    %cst_17 = arith.constant 2.000000e+00 : f32
    %45 = vector.broadcast %cst_17 : f32 to vector<2x32xf32>
    %46 = arith.mulf %45, %44 : vector<2x32xf32>
    %cst_18 = arith.constant 1.000000e+00 : f32
    %47 = vector.broadcast %cst_18 : f32 to vector<2x32xf32>
    %48 = arith.subf %46, %47 : vector<2x32xf32>
    %49 = vector.extract_strided_slice %41 {offsets = [0, 96], sizes = [2, 32], strides = [1, 1]} : vector<2x128xf32> to vector<2x32xf32>
    %50 = arith.mulf %43, %28 : vector<2x32xf32>
    %51 = arith.mulf %42, %48 : vector<2x32xf32>
    %52 = arith.addf %50, %51 : vector<2x32xf32>
    %53 = math.tanh %52 : vector<2x32xf32>
    %54 = arith.mulf %49, %53 : vector<2x32xf32>
    %55 = arith.truncf %54 : vector<2x32xf32> to vector<2x32xbf16>
    %c2 = arith.constant 2 : index
    %c0_19 = arith.constant 0 : index
    %56 = vector.load %arg12[%c2, %c0_19] : memref<16x32xbf16, #tpu.memory_space<vmem>>, vector<2x32xbf16>
    tpu.vector_store %arg12[%c2, %c0_19], %55 {strides = array<i32>} : memref<16x32xbf16, #tpu.memory_space<vmem>>, vector<2x32xbf16>,
    %57 = vector.extract_strided_slice %6 {offsets = [4, 0], sizes = [2, 128], strides = [1, 1]} : vector<16x128xf32> to vector<2x128xf32>
    %58 = arith.truncf %54 : vector<2x32xf32> to vector<2x32xbf16>
    %cst_20 = arith.constant dense<0.000000e+00> : vector<2x128xf32>
    %59 = tpu.matmul %58, %1, %cst_20 {dimension_numbers = #tpu.dot_dimension_numbers<[1], [0], [0], [1], [0, 0, 1, 1], [], []>} : vector<2x32xbf16>, vector<32x128xbf16>, vector<2x128xf32> -> vector<2x128xf32>
    %60 = arith.addf %57, %59 : vector<2x128xf32>
    %61 = arith.negf %60 : vector<2x128xf32>
    %62 = math.exp %61 : vector<2x128xf32>
    %cst_21 = arith.constant 1.000000e+00 : f32
    %63 = vector.broadcast %cst_21 : f32 to vector<2x128xf32>
    %64 = arith.addf %63, %62 : vector<2x128xf32>
    %65 = arith.divf %63, %64 : vector<2x128xf32>
    %66 = vector.extract_strided_slice %65 {offsets = [0, 0], sizes = [2, 32], strides = [1, 1]} : vector<2x128xf32> to vector<2x32xf32>
    %67 = vector.extract_strided_slice %65 {offsets = [0, 32], sizes = [2, 32], strides = [1, 1]} : vector<2x128xf32> to vector<2x32xf32>
    %68 = vector.extract_strided_slice %65 {offsets = [0, 64], sizes = [2, 32], strides = [1, 1]} : vector<2x128xf32> to vector<2x32xf32>
    %cst_22 = arith.constant 2.000000e+00 : f32
    %69 = vector.broadcast %cst_22 : f32 to vector<2x32xf32>
    %70 = arith.mulf %69, %68 : vector<2x32xf32>
    %cst_23 = arith.constant 1.000000e+00 : f32
    %71 = vector.broadcast %cst_23 : f32 to vector<2x32xf32>
    %72 = arith.subf %70, %71 : vector<2x32xf32>
    %73 = vector.extract_strided_slice %65 {offsets = [0, 96], sizes = [2, 32], strides = [1, 1]} : vector<2x128xf32> to vector<2x32xf32>
    %74 = arith.mulf %67, %52 : vector<2x32xf32>
    %75 = arith.mulf %66, %72 : vector<2x32xf32>
    %76 = arith.addf %74, %75 : vector<2x32xf32>
    %77 = math.tanh %76 : vector<2x32xf32>
    %78 = arith.mulf %73, %77 : vector<2x32xf32>
    %79 = arith.truncf %78 : vector<2x32xf32> to vector<2x32xbf16>
    %c4 = arith.constant 4 : index
    %c0_24 = arith.constant 0 : index
    %80 = vector.load %arg12[%c4, %c0_24] : memref<16x32xbf16, #tpu.memory_space<vmem>>, vector<2x32xbf16>
    tpu.vector_store %arg12[%c4, %c0_24], %79 {strides = array<i32>} : memref<16x32xbf16, #tpu.memory_space<vmem>>, vector<2x32xbf16>,
    %81 = vector.extract_strided_slice %6 {offsets = [6, 0], sizes = [2, 128], strides = [1, 1]} : vector<16x128xf32> to vector<2x128xf32>
    %82 = arith.truncf %78 : vector<2x32xf32> to vector<2x32xbf16>
    %cst_25 = arith.constant dense<0.000000e+00> : vector<2x128xf32>
    %83 = tpu.matmul %82, %1, %cst_25 {dimension_numbers = #tpu.dot_dimension_numbers<[1], [0], [0], [1], [0, 0, 1, 1], [], []>} : vector<2x32xbf16>, vector<32x128xbf16>, vector<2x128xf32> -> vector<2x128xf32>
    %84 = arith.addf %81, %83 : vector<2x128xf32>
    %85 = arith.negf %84 : vector<2x128xf32>
    %86 = math.exp %85 : vector<2x128xf32>
    %cst_26 = arith.constant 1.000000e+00 : f32
    %87 = vector.broadcast %cst_26 : f32 to vector<2x128xf32>
    %88 = arith.addf %87, %86 : vector<2x128xf32>
    %89 = arith.divf %87, %88 : vector<2x128xf32>
    %90 = vector.extract_strided_slice %89 {offsets = [0, 0], sizes = [2, 32], strides = [1, 1]} : vector<2x128xf32> to vector<2x32xf32>
    %91 = vector.extract_strided_slice %89 {offsets = [0, 32], sizes = [2, 32], strides = [1, 1]} : vector<2x128xf32> to vector<2x32xf32>
    %92 = vector.extract_strided_slice %89 {offsets = [0, 64], sizes = [2, 32], strides = [1, 1]} : vector<2x128xf32> to vector<2x32xf32>
    %cst_27 = arith.constant 2.000000e+00 : f32
    %93 = vector.broadcast %cst_27 : f32 to vector<2x32xf32>
    %94 = arith.mulf %93, %92 : vector<2x32xf32>
    %cst_28 = arith.constant 1.000000e+00 : f32
    %95 = vector.broadcast %cst_28 : f32 to vector<2x32xf32>
    %96 = arith.subf %94, %95 : vector<2x32xf32>
    %97 = vector.extract_strided_slice %89 {offsets = [0, 96], sizes = [2, 32], strides = [1, 1]} : vector<2x128xf32> to vector<2x32xf32>
    %98 = arith.mulf %91, %76 : vector<2x32xf32>
    %99 = arith.mulf %90, %96 : vector<2x32xf32>
    %100 = arith.addf %98, %99 : vector<2x32xf32>
    %101 = math.tanh %100 : vector<2x32xf32>
    %102 = arith.mulf %97, %101 : vector<2x32xf32>
    %103 = arith.truncf %102 : vector<2x32xf32> to vector<2x32xbf16>
    %c6 = arith.constant 6 : index
    %c0_29 = arith.constant 0 : index
    %104 = vector.load %arg12[%c6, %c0_29] : memref<16x32xbf16, #tpu.memory_space<vmem>>, vector<2x32xbf16>
    tpu.vector_store %arg12[%c6, %c0_29], %103 {strides = array<i32>} : memref<16x32xbf16, #tpu.memory_space<vmem>>, vector<2x32xbf16>,
    %105 = vector.extract_strided_slice %6 {offsets = [8, 0], sizes = [2, 128], strides = [1, 1]} : vector<16x128xf32> to vector<2x128xf32>
    %106 = arith.truncf %102 : vector<2x32xf32> to vector<2x32xbf16>
    %cst_30 = arith.constant dense<0.000000e+00> : vector<2x128xf32>
    %107 = tpu.matmul %106, %1, %cst_30 {dimension_numbers = #tpu.dot_dimension_numbers<[1], [0], [0], [1], [0, 0, 1, 1], [], []>} : vector<2x32xbf16>, vector<32x128xbf16>, vector<2x128xf32> -> vector<2x128xf32>
    %108 = arith.addf %105, %107 : vector<2x128xf32>
    %109 = arith.negf %108 : vector<2x128xf32>
    %110 = math.exp %109 : vector<2x128xf32>
    %cst_31 = arith.constant 1.000000e+00 : f32
    %111 = vector.broadcast %cst_31 : f32 to vector<2x128xf32>
    %112 = arith.addf %111, %110 : vector<2x128xf32>
    %113 = arith.divf %111, %112 : vector<2x128xf32>
    %114 = vector.extract_strided_slice %113 {offsets = [0, 0], sizes = [2, 32], strides = [1, 1]} : vector<2x128xf32> to vector<2x32xf32>
    %115 = vector.extract_strided_slice %113 {offsets = [0, 32], sizes = [2, 32], strides = [1, 1]} : vector<2x128xf32> to vector<2x32xf32>
    %116 = vector.extract_strided_slice %113 {offsets = [0, 64], sizes = [2, 32], strides = [1, 1]} : vector<2x128xf32> to vector<2x32xf32>
    %cst_32 = arith.constant 2.000000e+00 : f32
    %117 = vector.broadcast %cst_32 : f32 to vector<2x32xf32>
    %118 = arith.mulf %117, %116 : vector<2x32xf32>
    %cst_33 = arith.constant 1.000000e+00 : f32
    %119 = vector.broadcast %cst_33 : f32 to vector<2x32xf32>
    %120 = arith.subf %118, %119 : vector<2x32xf32>
    %121 = vector.extract_strided_slice %113 {offsets = [0, 96], sizes = [2, 32], strides = [1, 1]} : vector<2x128xf32> to vector<2x32xf32>
    %122 = arith.mulf %115, %100 : vector<2x32xf32>
    %123 = arith.mulf %114, %120 : vector<2x32xf32>
    %124 = arith.addf %122, %123 : vector<2x32xf32>
    %125 = math.tanh %124 : vector<2x32xf32>
    %126 = arith.mulf %121, %125 : vector<2x32xf32>
    %127 = arith.truncf %126 : vector<2x32xf32> to vector<2x32xbf16>
    %c8 = arith.constant 8 : index
    %c0_34 = arith.constant 0 : index
    %128 = vector.load %arg12[%c8, %c0_34] : memref<16x32xbf16, #tpu.memory_space<vmem>>, vector<2x32xbf16>
    tpu.vector_store %arg12[%c8, %c0_34], %127 {strides = array<i32>} : memref<16x32xbf16, #tpu.memory_space<vmem>>, vector<2x32xbf16>,
    %129 = vector.extract_strided_slice %6 {offsets = [10, 0], sizes = [2, 128], strides = [1, 1]} : vector<16x128xf32> to vector<2x128xf32>
    %130 = arith.truncf %126 : vector<2x32xf32> to vector<2x32xbf16>
    %cst_35 = arith.constant dense<0.000000e+00> : vector<2x128xf32>
    %131 = tpu.matmul %130, %1, %cst_35 {dimension_numbers = #tpu.dot_dimension_numbers<[1], [0], [0], [1], [0, 0, 1, 1], [], []>} : vector<2x32xbf16>, vector<32x128xbf16>, vector<2x128xf32> -> vector<2x128xf32>
    %132 = arith.addf %129, %131 : vector<2x128xf32>
    %133 = arith.negf %132 : vector<2x128xf32>
    %134 = math.exp %133 : vector<2x128xf32>
    %cst_36 = arith.constant 1.000000e+00 : f32
    %135 = vector.broadcast %cst_36 : f32 to vector<2x128xf32>
    %136 = arith.addf %135, %134 : vector<2x128xf32>
    %137 = arith.divf %135, %136 : vector<2x128xf32>
    %138 = vector.extract_strided_slice %137 {offsets = [0, 0], sizes = [2, 32], strides = [1, 1]} : vector<2x128xf32> to vector<2x32xf32>
    %139 = vector.extract_strided_slice %137 {offsets = [0, 32], sizes = [2, 32], strides = [1, 1]} : vector<2x128xf32> to vector<2x32xf32>
    %140 = vector.extract_strided_slice %137 {offsets = [0, 64], sizes = [2, 32], strides = [1, 1]} : vector<2x128xf32> to vector<2x32xf32>
    %cst_37 = arith.constant 2.000000e+00 : f32
    %141 = vector.broadcast %cst_37 : f32 to vector<2x32xf32>
    %142 = arith.mulf %141, %140 : vector<2x32xf32>
    %cst_38 = arith.constant 1.000000e+00 : f32
    %143 = vector.broadcast %cst_38 : f32 to vector<2x32xf32>
    %144 = arith.subf %142, %143 : vector<2x32xf32>
    %145 = vector.extract_strided_slice %137 {offsets = [0, 96], sizes = [2, 32], strides = [1, 1]} : vector<2x128xf32> to vector<2x32xf32>
    %146 = arith.mulf %139, %124 : vector<2x32xf32>
    %147 = arith.mulf %138, %144 : vector<2x32xf32>
    %148 = arith.addf %146, %147 : vector<2x32xf32>
    %149 = math.tanh %148 : vector<2x32xf32>
    %150 = arith.mulf %145, %149 : vector<2x32xf32>
    %151 = arith.truncf %150 : vector<2x32xf32> to vector<2x32xbf16>
    %c10 = arith.constant 10 : index
    %c0_39 = arith.constant 0 : index
    %152 = vector.load %arg12[%c10, %c0_39] : memref<16x32xbf16, #tpu.memory_space<vmem>>, vector<2x32xbf16>
    tpu.vector_store %arg12[%c10, %c0_39], %151 {strides = array<i32>} : memref<16x32xbf16, #tpu.memory_space<vmem>>, vector<2x32xbf16>,
    %153 = vector.extract_strided_slice %6 {offsets = [12, 0], sizes = [2, 128], strides = [1, 1]} : vector<16x128xf32> to vector<2x128xf32>
    %154 = arith.truncf %150 : vector<2x32xf32> to vector<2x32xbf16>
    %cst_40 = arith.constant dense<0.000000e+00> : vector<2x128xf32>
    %155 = tpu.matmul %154, %1, %cst_40 {dimension_numbers = #tpu.dot_dimension_numbers<[1], [0], [0], [1], [0, 0, 1, 1], [], []>} : vector<2x32xbf16>, vector<32x128xbf16>, vector<2x128xf32> -> vector<2x128xf32>
    %156 = arith.addf %153, %155 : vector<2x128xf32>
    %157 = arith.negf %156 : vector<2x128xf32>
    %158 = math.exp %157 : vector<2x128xf32>
    %cst_41 = arith.constant 1.000000e+00 : f32
    %159 = vector.broadcast %cst_41 : f32 to vector<2x128xf32>
    %160 = arith.addf %159, %158 : vector<2x128xf32>
    %161 = arith.divf %159, %160 : vector<2x128xf32>
    %162 = vector.extract_strided_slice %161 {offsets = [0, 0], sizes = [2, 32], strides = [1, 1]} : vector<2x128xf32> to vector<2x32xf32>
    %163 = vector.extract_strided_slice %161 {offsets = [0, 32], sizes = [2, 32], strides = [1, 1]} : vector<2x128xf32> to vector<2x32xf32>
    %164 = vector.extract_strided_slice %161 {offsets = [0, 64], sizes = [2, 32], strides = [1, 1]} : vector<2x128xf32> to vector<2x32xf32>
    %cst_42 = arith.constant 2.000000e+00 : f32
    %165 = vector.broadcast %cst_42 : f32 to vector<2x32xf32>
    %166 = arith.mulf %165, %164 : vector<2x32xf32>
    %cst_43 = arith.constant 1.000000e+00 : f32
    %167 = vector.broadcast %cst_43 : f32 to vector<2x32xf32>
    %168 = arith.subf %166, %167 : vector<2x32xf32>
    %169 = vector.extract_strided_slice %161 {offsets = [0, 96], sizes = [2, 32], strides = [1, 1]} : vector<2x128xf32> to vector<2x32xf32>
    %170 = arith.mulf %163, %148 : vector<2x32xf32>
    %171 = arith.mulf %162, %168 : vector<2x32xf32>
    %172 = arith.addf %170, %171 : vector<2x32xf32>
    %173 = math.tanh %172 : vector<2x32xf32>
    %174 = arith.mulf %169, %173 : vector<2x32xf32>
    %175 = arith.truncf %174 : vector<2x32xf32> to vector<2x32xbf16>
    %c12 = arith.constant 12 : index
    %c0_44 = arith.constant 0 : index
    %176 = vector.load %arg12[%c12, %c0_44] : memref<16x32xbf16, #tpu.memory_space<vmem>>, vector<2x32xbf16>
    tpu.vector_store %arg12[%c12, %c0_44], %175 {strides = array<i32>} : memref<16x32xbf16, #tpu.memory_space<vmem>>, vector<2x32xbf16>,
    %177 = vector.extract_strided_slice %6 {offsets = [14, 0], sizes = [2, 128], strides = [1, 1]} : vector<16x128xf32> to vector<2x128xf32>
    %178 = arith.truncf %174 : vector<2x32xf32> to vector<2x32xbf16>
    %cst_45 = arith.constant dense<0.000000e+00> : vector<2x128xf32>
    %179 = tpu.matmul %178, %1, %cst_45 {dimension_numbers = #tpu.dot_dimension_numbers<[1], [0], [0], [1], [0, 0, 1, 1], [], []>} : vector<2x32xbf16>, vector<32x128xbf16>, vector<2x128xf32> -> vector<2x128xf32>
    %180 = arith.addf %177, %179 : vector<2x128xf32>
    %181 = arith.negf %180 : vector<2x128xf32>
    %182 = math.exp %181 : vector<2x128xf32>
    %cst_46 = arith.constant 1.000000e+00 : f32
    %183 = vector.broadcast %cst_46 : f32 to vector<2x128xf32>
    %184 = arith.addf %183, %182 : vector<2x128xf32>
    %185 = arith.divf %183, %184 : vector<2x128xf32>
    %186 = vector.extract_strided_slice %185 {offsets = [0, 0], sizes = [2, 32], strides = [1, 1]} : vector<2x128xf32> to vector<2x32xf32>
    %187 = vector.extract_strided_slice %185 {offsets = [0, 32], sizes = [2, 32], strides = [1, 1]} : vector<2x128xf32> to vector<2x32xf32>
    %188 = vector.extract_strided_slice %185 {offsets = [0, 64], sizes = [2, 32], strides = [1, 1]} : vector<2x128xf32> to vector<2x32xf32>
    %cst_47 = arith.constant 2.000000e+00 : f32
    %189 = vector.broadcast %cst_47 : f32 to vector<2x32xf32>
    %190 = arith.mulf %189, %188 : vector<2x32xf32>
    %cst_48 = arith.constant 1.000000e+00 : f32
    %191 = vector.broadcast %cst_48 : f32 to vector<2x32xf32>
    %192 = arith.subf %190, %191 : vector<2x32xf32>
    %193 = vector.extract_strided_slice %185 {offsets = [0, 96], sizes = [2, 32], strides = [1, 1]} : vector<2x128xf32> to vector<2x32xf32>
    %194 = arith.mulf %187, %172 : vector<2x32xf32>
    %195 = arith.mulf %186, %192 : vector<2x32xf32>
    %196 = arith.addf %194, %195 : vector<2x32xf32>
    %197 = math.tanh %196 : vector<2x32xf32>
    %198 = arith.mulf %193, %197 : vector<2x32xf32>
    %199 = arith.truncf %198 : vector<2x32xf32> to vector<2x32xbf16>
    %c14 = arith.constant 14 : index
    %c0_49 = arith.constant 0 : index
    %200 = vector.load %arg12[%c14, %c0_49] : memref<16x32xbf16, #tpu.memory_space<vmem>>, vector<2x32xbf16>
    tpu.vector_store %arg12[%c14, %c0_49], %199 {strides = array<i32>} : memref<16x32xbf16, #tpu.memory_space<vmem>>, vector<2x32xbf16>,
    %c0_50 = arith.constant 0 : index
    %c0_51 = arith.constant 0 : index
    %201 = vector.load %arg4[%c0_50, %c0_51] : memref<32x128xbf16, #tpu.memory_space<vmem>>, vector<32x128xbf16>
    %c0_52 = arith.constant 0 : index
    %c0_53 = arith.constant 0 : index
    %202 = vector.load %arg5[%c0_52, %c0_53] : memref<32x128xbf16, #tpu.memory_space<vmem>>, vector<32x128xbf16>
    %c0_54 = arith.constant 0 : index
    %c0_55 = arith.constant 0 : index
    %203 = vector.load %arg6[%c0_54, %c0_55] : memref<1x128xf32, #tpu.memory_space<vmem>>, vector<1x128xf32>
    %c0_56 = arith.constant 0 : index
    %c0_57 = arith.constant 0 : index
    %204 = vector.load %arg12[%c0_56, %c0_57] : memref<16x32xbf16, #tpu.memory_space<vmem>>, vector<16x32xbf16>
    %cst_58 = arith.constant dense<0.000000e+00> : vector<16x128xf32>
    %205 = tpu.matmul %204, %201, %cst_58 {dimension_numbers = #tpu.dot_dimension_numbers<[1], [0], [0], [1], [0, 0, 1, 1], [], []>} : vector<16x32xbf16>, vector<32x128xbf16>, vector<16x128xf32> -> vector<16x128xf32>
    %206 = vector.broadcast %203 : vector<1x128xf32> to vector<16x128xf32>
    %207 = arith.addf %205, %206 : vector<16x128xf32>
    %cst_59 = arith.constant 0.000000e+00 : f32
    %208 = vector.broadcast %cst_59 : f32 to vector<2x32xf32>
    %cst_60 = arith.constant 0.000000e+00 : f32
    %209 = vector.broadcast %cst_60 : f32 to vector<2x32xf32>
    %210 = vector.extract_strided_slice %207 {offsets = [0, 0], sizes = [2, 128], strides = [1, 1]} : vector<16x128xf32> to vector<2x128xf32>
    %211 = arith.truncf %208 : vector<2x32xf32> to vector<2x32xbf16>
    %cst_61 = arith.constant dense<0.000000e+00> : vector<2x128xf32>
    %212 = tpu.matmul %211, %202, %cst_61 {dimension_numbers = #tpu.dot_dimension_numbers<[1], [0], [0], [1], [0, 0, 1, 1], [], []>} : vector<2x32xbf16>, vector<32x128xbf16>, vector<2x128xf32> -> vector<2x128xf32>
    %213 = arith.addf %210, %212 : vector<2x128xf32>
    %214 = arith.negf %213 : vector<2x128xf32>
    %215 = math.exp %214 : vector<2x128xf32>
    %cst_62 = arith.constant 1.000000e+00 : f32
    %216 = vector.broadcast %cst_62 : f32 to vector<2x128xf32>
    %217 = arith.addf %216, %215 : vector<2x128xf32>
    %218 = arith.divf %216, %217 : vector<2x128xf32>
    %219 = vector.extract_strided_slice %218 {offsets = [0, 0], sizes = [2, 32], strides = [1, 1]} : vector<2x128xf32> to vector<2x32xf32>
    %220 = vector.extract_strided_slice %218 {offsets = [0, 32], sizes = [2, 32], strides = [1, 1]} : vector<2x128xf32> to vector<2x32xf32>
    %221 = vector.extract_strided_slice %218 {offsets = [0, 64], sizes = [2, 32], strides = [1, 1]} : vector<2x128xf32> to vector<2x32xf32>
    %cst_63 = arith.constant 2.000000e+00 : f32
    %222 = vector.broadcast %cst_63 : f32 to vector<2x32xf32>
    %223 = arith.mulf %222, %221 : vector<2x32xf32>
    %cst_64 = arith.constant 1.000000e+00 : f32
    %224 = vector.broadcast %cst_64 : f32 to vector<2x32xf32>
    %225 = arith.subf %223, %224 : vector<2x32xf32>
    %226 = vector.extract_strided_slice %218 {offsets = [0, 96], sizes = [2, 32], strides = [1, 1]} : vector<2x128xf32> to vector<2x32xf32>
    %227 = arith.mulf %220, %209 : vector<2x32xf32>
    %228 = arith.mulf %219, %225 : vector<2x32xf32>
    %229 = arith.addf %227, %228 : vector<2x32xf32>
    %230 = math.tanh %229 : vector<2x32xf32>
    %231 = arith.mulf %226, %230 : vector<2x32xf32>
    %232 = vector.extract_strided_slice %207 {offsets = [2, 0], sizes = [2, 128], strides = [1, 1]} : vector<16x128xf32> to vector<2x128xf32>
    %233 = arith.truncf %231 : vector<2x32xf32> to vector<2x32xbf16>
    %cst_65 = arith.constant dense<0.000000e+00> : vector<2x128xf32>
    %234 = tpu.matmul %233, %202, %cst_65 {dimension_numbers = #tpu.dot_dimension_numbers<[1], [0], [0], [1], [0, 0, 1, 1], [], []>} : vector<2x32xbf16>, vector<32x128xbf16>, vector<2x128xf32> -> vector<2x128xf32>
    %235 = arith.addf %232, %234 : vector<2x128xf32>
    %236 = arith.negf %235 : vector<2x128xf32>
    %237 = math.exp %236 : vector<2x128xf32>
    %cst_66 = arith.constant 1.000000e+00 : f32
    %238 = vector.broadcast %cst_66 : f32 to vector<2x128xf32>
    %239 = arith.addf %238, %237 : vector<2x128xf32>
    %240 = arith.divf %238, %239 : vector<2x128xf32>
    %241 = vector.extract_strided_slice %240 {offsets = [0, 0], sizes = [2, 32], strides = [1, 1]} : vector<2x128xf32> to vector<2x32xf32>
    %242 = vector.extract_strided_slice %240 {offsets = [0, 32], sizes = [2, 32], strides = [1, 1]} : vector<2x128xf32> to vector<2x32xf32>
    %243 = vector.extract_strided_slice %240 {offsets = [0, 64], sizes = [2, 32], strides = [1, 1]} : vector<2x128xf32> to vector<2x32xf32>
    %cst_67 = arith.constant 2.000000e+00 : f32
    %244 = vector.broadcast %cst_67 : f32 to vector<2x32xf32>
    %245 = arith.mulf %244, %243 : vector<2x32xf32>
    %cst_68 = arith.constant 1.000000e+00 : f32
    %246 = vector.broadcast %cst_68 : f32 to vector<2x32xf32>
    %247 = arith.subf %245, %246 : vector<2x32xf32>
    %248 = vector.extract_strided_slice %240 {offsets = [0, 96], sizes = [2, 32], strides = [1, 1]} : vector<2x128xf32> to vector<2x32xf32>
    %249 = arith.mulf %242, %229 : vector<2x32xf32>
    %250 = arith.mulf %241, %247 : vector<2x32xf32>
    %251 = arith.addf %249, %250 : vector<2x32xf32>
    %252 = math.tanh %251 : vector<2x32xf32>
    %253 = arith.mulf %248, %252 : vector<2x32xf32>
    %254 = vector.extract_strided_slice %207 {offsets = [4, 0], sizes = [2, 128], strides = [1, 1]} : vector<16x128xf32> to vector<2x128xf32>
    %255 = arith.truncf %253 : vector<2x32xf32> to vector<2x32xbf16>
    %cst_69 = arith.constant dense<0.000000e+00> : vector<2x128xf32>
    %256 = tpu.matmul %255, %202, %cst_69 {dimension_numbers = #tpu.dot_dimension_numbers<[1], [0], [0], [1], [0, 0, 1, 1], [], []>} : vector<2x32xbf16>, vector<32x128xbf16>, vector<2x128xf32> -> vector<2x128xf32>
    %257 = arith.addf %254, %256 : vector<2x128xf32>
    %258 = arith.negf %257 : vector<2x128xf32>
    %259 = math.exp %258 : vector<2x128xf32>
    %cst_70 = arith.constant 1.000000e+00 : f32
    %260 = vector.broadcast %cst_70 : f32 to vector<2x128xf32>
    %261 = arith.addf %260, %259 : vector<2x128xf32>
    %262 = arith.divf %260, %261 : vector<2x128xf32>
    %263 = vector.extract_strided_slice %262 {offsets = [0, 0], sizes = [2, 32], strides = [1, 1]} : vector<2x128xf32> to vector<2x32xf32>
    %264 = vector.extract_strided_slice %262 {offsets = [0, 32], sizes = [2, 32], strides = [1, 1]} : vector<2x128xf32> to vector<2x32xf32>
    %265 = vector.extract_strided_slice %262 {offsets = [0, 64], sizes = [2, 32], strides = [1, 1]} : vector<2x128xf32> to vector<2x32xf32>
    %cst_71 = arith.constant 2.000000e+00 : f32
    %266 = vector.broadcast %cst_71 : f32 to vector<2x32xf32>
    %267 = arith.mulf %266, %265 : vector<2x32xf32>
    %cst_72 = arith.constant 1.000000e+00 : f32
    %268 = vector.broadcast %cst_72 : f32 to vector<2x32xf32>
    %269 = arith.subf %267, %268 : vector<2x32xf32>
    %270 = vector.extract_strided_slice %262 {offsets = [0, 96], sizes = [2, 32], strides = [1, 1]} : vector<2x128xf32> to vector<2x32xf32>
    %271 = arith.mulf %264, %251 : vector<2x32xf32>
    %272 = arith.mulf %263, %269 : vector<2x32xf32>
    %273 = arith.addf %271, %272 : vector<2x32xf32>
    %274 = math.tanh %273 : vector<2x32xf32>
    %275 = arith.mulf %270, %274 : vector<2x32xf32>
    %276 = vector.extract_strided_slice %207 {offsets = [6, 0], sizes = [2, 128], strides = [1, 1]} : vector<16x128xf32> to vector<2x128xf32>
    %277 = arith.truncf %275 : vector<2x32xf32> to vector<2x32xbf16>
    %cst_73 = arith.constant dense<0.000000e+00> : vector<2x128xf32>
    %278 = tpu.matmul %277, %202, %cst_73 {dimension_numbers = #tpu.dot_dimension_numbers<[1], [0], [0], [1], [0, 0, 1, 1], [], []>} : vector<2x32xbf16>, vector<32x128xbf16>, vector<2x128xf32> -> vector<2x128xf32>
    %279 = arith.addf %276, %278 : vector<2x128xf32>
    %280 = arith.negf %279 : vector<2x128xf32>
    %281 = math.exp %280 : vector<2x128xf32>
    %cst_74 = arith.constant 1.000000e+00 : f32
    %282 = vector.broadcast %cst_74 : f32 to vector<2x128xf32>
    %283 = arith.addf %282, %281 : vector<2x128xf32>
    %284 = arith.divf %282, %283 : vector<2x128xf32>
    %285 = vector.extract_strided_slice %284 {offsets = [0, 0], sizes = [2, 32], strides = [1, 1]} : vector<2x128xf32> to vector<2x32xf32>
    %286 = vector.extract_strided_slice %284 {offsets = [0, 32], sizes = [2, 32], strides = [1, 1]} : vector<2x128xf32> to vector<2x32xf32>
    %287 = vector.extract_strided_slice %284 {offsets = [0, 64], sizes = [2, 32], strides = [1, 1]} : vector<2x128xf32> to vector<2x32xf32>
    %cst_75 = arith.constant 2.000000e+00 : f32
    %288 = vector.broadcast %cst_75 : f32 to vector<2x32xf32>
    %289 = arith.mulf %288, %287 : vector<2x32xf32>
    %cst_76 = arith.constant 1.000000e+00 : f32
    %290 = vector.broadcast %cst_76 : f32 to vector<2x32xf32>
    %291 = arith.subf %289, %290 : vector<2x32xf32>
    %292 = vector.extract_strided_slice %284 {offsets = [0, 96], sizes = [2, 32], strides = [1, 1]} : vector<2x128xf32> to vector<2x32xf32>
    %293 = arith.mulf %286, %273 : vector<2x32xf32>
    %294 = arith.mulf %285, %291 : vector<2x32xf32>
    %295 = arith.addf %293, %294 : vector<2x32xf32>
    %296 = math.tanh %295 : vector<2x32xf32>
    %297 = arith.mulf %292, %296 : vector<2x32xf32>
    %298 = vector.extract_strided_slice %207 {offsets = [8, 0], sizes = [2, 128], strides = [1, 1]} : vector<16x128xf32> to vector<2x128xf32>
    %299 = arith.truncf %297 : vector<2x32xf32> to vector<2x32xbf16>
    %cst_77 = arith.constant dense<0.000000e+00> : vector<2x128xf32>
    %300 = tpu.matmul %299, %202, %cst_77 {dimension_numbers = #tpu.dot_dimension_numbers<[1], [0], [0], [1], [0, 0, 1, 1], [], []>} : vector<2x32xbf16>, vector<32x128xbf16>, vector<2x128xf32> -> vector<2x128xf32>
    %301 = arith.addf %298, %300 : vector<2x128xf32>
    %302 = arith.negf %301 : vector<2x128xf32>
    %303 = math.exp %302 : vector<2x128xf32>
    %cst_78 = arith.constant 1.000000e+00 : f32
    %304 = vector.broadcast %cst_78 : f32 to vector<2x128xf32>
    %305 = arith.addf %304, %303 : vector<2x128xf32>
    %306 = arith.divf %304, %305 : vector<2x128xf32>
    %307 = vector.extract_strided_slice %306 {offsets = [0, 0], sizes = [2, 32], strides = [1, 1]} : vector<2x128xf32> to vector<2x32xf32>
    %308 = vector.extract_strided_slice %306 {offsets = [0, 32], sizes = [2, 32], strides = [1, 1]} : vector<2x128xf32> to vector<2x32xf32>
    %309 = vector.extract_strided_slice %306 {offsets = [0, 64], sizes = [2, 32], strides = [1, 1]} : vector<2x128xf32> to vector<2x32xf32>
    %cst_79 = arith.constant 2.000000e+00 : f32
    %310 = vector.broadcast %cst_79 : f32 to vector<2x32xf32>
    %311 = arith.mulf %310, %309 : vector<2x32xf32>
    %cst_80 = arith.constant 1.000000e+00 : f32
    %312 = vector.broadcast %cst_80 : f32 to vector<2x32xf32>
    %313 = arith.subf %311, %312 : vector<2x32xf32>
    %314 = vector.extract_strided_slice %306 {offsets = [0, 96], sizes = [2, 32], strides = [1, 1]} : vector<2x128xf32> to vector<2x32xf32>
    %315 = arith.mulf %308, %295 : vector<2x32xf32>
    %316 = arith.mulf %307, %313 : vector<2x32xf32>
    %317 = arith.addf %315, %316 : vector<2x32xf32>
    %318 = math.tanh %317 : vector<2x32xf32>
    %319 = arith.mulf %314, %318 : vector<2x32xf32>
    %320 = vector.extract_strided_slice %207 {offsets = [10, 0], sizes = [2, 128], strides = [1, 1]} : vector<16x128xf32> to vector<2x128xf32>
    %321 = arith.truncf %319 : vector<2x32xf32> to vector<2x32xbf16>
    %cst_81 = arith.constant dense<0.000000e+00> : vector<2x128xf32>
    %322 = tpu.matmul %321, %202, %cst_81 {dimension_numbers = #tpu.dot_dimension_numbers<[1], [0], [0], [1], [0, 0, 1, 1], [], []>} : vector<2x32xbf16>, vector<32x128xbf16>, vector<2x128xf32> -> vector<2x128xf32>
    %323 = arith.addf %320, %322 : vector<2x128xf32>
    %324 = arith.negf %323 : vector<2x128xf32>
    %325 = math.exp %324 : vector<2x128xf32>
    %cst_82 = arith.constant 1.000000e+00 : f32
    %326 = vector.broadcast %cst_82 : f32 to vector<2x128xf32>
    %327 = arith.addf %326, %325 : vector<2x128xf32>
    %328 = arith.divf %326, %327 : vector<2x128xf32>
    %329 = vector.extract_strided_slice %328 {offsets = [0, 0], sizes = [2, 32], strides = [1, 1]} : vector<2x128xf32> to vector<2x32xf32>
    %330 = vector.extract_strided_slice %328 {offsets = [0, 32], sizes = [2, 32], strides = [1, 1]} : vector<2x128xf32> to vector<2x32xf32>
    %331 = vector.extract_strided_slice %328 {offsets = [0, 64], sizes = [2, 32], strides = [1, 1]} : vector<2x128xf32> to vector<2x32xf32>
    %cst_83 = arith.constant 2.000000e+00 : f32
    %332 = vector.broadcast %cst_83 : f32 to vector<2x32xf32>
    %333 = arith.mulf %332, %331 : vector<2x32xf32>
    %cst_84 = arith.constant 1.000000e+00 : f32
    %334 = vector.broadcast %cst_84 : f32 to vector<2x32xf32>
    %335 = arith.subf %333, %334 : vector<2x32xf32>
    %336 = vector.extract_strided_slice %328 {offsets = [0, 96], sizes = [2, 32], strides = [1, 1]} : vector<2x128xf32> to vector<2x32xf32>
    %337 = arith.mulf %330, %317 : vector<2x32xf32>
    %338 = arith.mulf %329, %335 : vector<2x32xf32>
    %339 = arith.addf %337, %338 : vector<2x32xf32>
    %340 = math.tanh %339 : vector<2x32xf32>
    %341 = arith.mulf %336, %340 : vector<2x32xf32>
    %342 = vector.extract_strided_slice %207 {offsets = [12, 0], sizes = [2, 128], strides = [1, 1]} : vector<16x128xf32> to vector<2x128xf32>
    %343 = arith.truncf %341 : vector<2x32xf32> to vector<2x32xbf16>
    %cst_85 = arith.constant dense<0.000000e+00> : vector<2x128xf32>
    %344 = tpu.matmul %343, %202, %cst_85 {dimension_numbers = #tpu.dot_dimension_numbers<[1], [0], [0], [1], [0, 0, 1, 1], [], []>} : vector<2x32xbf16>, vector<32x128xbf16>, vector<2x128xf32> -> vector<2x128xf32>
    %345 = arith.addf %342, %344 : vector<2x128xf32>
    %346 = arith.negf %345 : vector<2x128xf32>
    %347 = math.exp %346 : vector<2x128xf32>
    %cst_86 = arith.constant 1.000000e+00 : f32
    %348 = vector.broadcast %cst_86 : f32 to vector<2x128xf32>
    %349 = arith.addf %348, %347 : vector<2x128xf32>
    %350 = arith.divf %348, %349 : vector<2x128xf32>
    %351 = vector.extract_strided_slice %350 {offsets = [0, 0], sizes = [2, 32], strides = [1, 1]} : vector<2x128xf32> to vector<2x32xf32>
    %352 = vector.extract_strided_slice %350 {offsets = [0, 32], sizes = [2, 32], strides = [1, 1]} : vector<2x128xf32> to vector<2x32xf32>
    %353 = vector.extract_strided_slice %350 {offsets = [0, 64], sizes = [2, 32], strides = [1, 1]} : vector<2x128xf32> to vector<2x32xf32>
    %cst_87 = arith.constant 2.000000e+00 : f32
    %354 = vector.broadcast %cst_87 : f32 to vector<2x32xf32>
    %355 = arith.mulf %354, %353 : vector<2x32xf32>
    %cst_88 = arith.constant 1.000000e+00 : f32
    %356 = vector.broadcast %cst_88 : f32 to vector<2x32xf32>
    %357 = arith.subf %355, %356 : vector<2x32xf32>
    %358 = vector.extract_strided_slice %350 {offsets = [0, 96], sizes = [2, 32], strides = [1, 1]} : vector<2x128xf32> to vector<2x32xf32>
    %359 = arith.mulf %352, %339 : vector<2x32xf32>
    %360 = arith.mulf %351, %357 : vector<2x32xf32>
    %361 = arith.addf %359, %360 : vector<2x32xf32>
    %362 = math.tanh %361 : vector<2x32xf32>
    %363 = arith.mulf %358, %362 : vector<2x32xf32>
    %364 = vector.extract_strided_slice %207 {offsets = [14, 0], sizes = [2, 128], strides = [1, 1]} : vector<16x128xf32> to vector<2x128xf32>
    %365 = arith.truncf %363 : vector<2x32xf32> to vector<2x32xbf16>
    %cst_89 = arith.constant dense<0.000000e+00> : vector<2x128xf32>
    %366 = tpu.matmul %365, %202, %cst_89 {dimension_numbers = #tpu.dot_dimension_numbers<[1], [0], [0], [1], [0, 0, 1, 1], [], []>} : vector<2x32xbf16>, vector<32x128xbf16>, vector<2x128xf32> -> vector<2x128xf32>
    %367 = arith.addf %364, %366 : vector<2x128xf32>
    %368 = arith.negf %367 : vector<2x128xf32>
    %369 = math.exp %368 : vector<2x128xf32>
    %cst_90 = arith.constant 1.000000e+00 : f32
    %370 = vector.broadcast %cst_90 : f32 to vector<2x128xf32>
    %371 = arith.addf %370, %369 : vector<2x128xf32>
    %372 = arith.divf %370, %371 : vector<2x128xf32>
    %373 = vector.extract_strided_slice %372 {offsets = [0, 0], sizes = [2, 32], strides = [1, 1]} : vector<2x128xf32> to vector<2x32xf32>
    %374 = vector.extract_strided_slice %372 {offsets = [0, 32], sizes = [2, 32], strides = [1, 1]} : vector<2x128xf32> to vector<2x32xf32>
    %375 = vector.extract_strided_slice %372 {offsets = [0, 64], sizes = [2, 32], strides = [1, 1]} : vector<2x128xf32> to vector<2x32xf32>
    %cst_91 = arith.constant 2.000000e+00 : f32
    %376 = vector.broadcast %cst_91 : f32 to vector<2x32xf32>
    %377 = arith.mulf %376, %375 : vector<2x32xf32>
    %cst_92 = arith.constant 1.000000e+00 : f32
    %378 = vector.broadcast %cst_92 : f32 to vector<2x32xf32>
    %379 = arith.subf %377, %378 : vector<2x32xf32>
    %380 = vector.extract_strided_slice %372 {offsets = [0, 96], sizes = [2, 32], strides = [1, 1]} : vector<2x128xf32> to vector<2x32xf32>
    %381 = arith.mulf %374, %361 : vector<2x32xf32>
    %382 = arith.mulf %373, %379 : vector<2x32xf32>
    %383 = arith.addf %381, %382 : vector<2x32xf32>
    %384 = math.tanh %383 : vector<2x32xf32>
    %385 = arith.mulf %380, %384 : vector<2x32xf32>
    %cst_93 = arith.constant dense<0.000000e+00> : vector<2xf32>
    %386 = vector.multi_reduction <add>, %385, %cst_93 [1] : vector<2x32xf32> to vector<2xf32>
    %387 = vector.shape_cast %386 : vector<2xf32> to vector<2x1xf32>
    %cst_94 = arith.constant 3.200000e+01 : f32
    %388 = vector.broadcast %cst_94 : f32 to vector<2x1xf32>
    %389 = arith.divf %387, %388 : vector<2x1xf32>
    %390 = vector.broadcast %389 : vector<2x1xf32> to vector<2x32xf32>
    %391 = arith.subf %385, %390 : vector<2x32xf32>
    %392 = arith.mulf %391, %391 : vector<2x32xf32>
    %cst_95 = arith.constant dense<0.000000e+00> : vector<2xf32>
    %393 = vector.multi_reduction <add>, %392, %cst_95 [1] : vector<2x32xf32> to vector<2xf32>
    %394 = vector.shape_cast %393 : vector<2xf32> to vector<2x1xf32>
    %cst_96 = arith.constant 3.200000e+01 : f32
    %395 = vector.broadcast %cst_96 : f32 to vector<2x1xf32>
    %396 = arith.divf %394, %395 : vector<2x1xf32>
    %397 = vector.broadcast %389 : vector<2x1xf32> to vector<2x32xf32>
    %398 = arith.subf %385, %397 : vector<2x32xf32>
    %cst_97 = arith.constant 9.99999974E-6 : f32
    %399 = vector.broadcast %cst_97 : f32 to vector<2x1xf32>
    %400 = arith.addf %396, %399 : vector<2x1xf32>
    %401 = math.rsqrt %400 : vector<2x1xf32>
    %402 = vector.broadcast %401 : vector<2x1xf32> to vector<2x32xf32>
    %403 = arith.mulf %398, %402 : vector<2x32xf32>
    %c0_98 = arith.constant 0 : index
    %c0_99 = arith.constant 0 : index
    %404 = vector.load %arg7[%c0_98, %c0_99] : memref<1x32xf32, #tpu.memory_space<vmem>>, vector<1x32xf32>
    %405 = vector.broadcast %404 : vector<1x32xf32> to vector<2x32xf32>
    %406 = arith.mulf %403, %405 : vector<2x32xf32>
    %c0_100 = arith.constant 0 : index
    %c0_101 = arith.constant 0 : index
    %407 = vector.load %arg8[%c0_100, %c0_101] : memref<1x32xf32, #tpu.memory_space<vmem>>, vector<1x32xf32>
    %408 = vector.broadcast %407 : vector<1x32xf32> to vector<2x32xf32>
    %409 = arith.addf %406, %408 : vector<2x32xf32>
    %c0_102 = arith.constant 0 : index
    %c0_103 = arith.constant 0 : index
    %410 = vector.load %arg9[%c0_102, %c0_103] : memref<32x4xf32, #tpu.memory_space<vmem>>, vector<32x4xf32>
    %cst_104 = arith.constant dense<0.000000e+00> : vector<2x4xf32>
    %411 = tpu.matmul %409, %410, %cst_104 {dimension_numbers = #tpu.dot_dimension_numbers<[1], [0], [0], [1], [0, 0, 1, 1], [], []>} : vector<2x32xf32>, vector<32x4xf32>, vector<2x4xf32> -> vector<2x4xf32>
    %c0_105 = arith.constant 0 : index
    %c0_106 = arith.constant 0 : index
    %412 = vector.load %arg10[%c0_105, %c0_106] : memref<1x4xf32, #tpu.memory_space<vmem>>, vector<1x4xf32>
    %413 = vector.broadcast %412 : vector<1x4xf32> to vector<2x4xf32>
    %414 = arith.addf %411, %413 : vector<2x4xf32>
    %c0_107 = arith.constant 0 : index
    %c0_108 = arith.constant 0 : index
    %415 = vector.load %arg11[%c0_107, %c0_108] : memref<2x4xf32, #tpu.memory_space<vmem>>, vector<2x4xf32>
    tpu.vector_store %arg11[%c0_107, %c0_108], %414 {strides = array<i32>} : memref<2x4xf32, #tpu.memory_space<vmem>>, vector<2x4xf32>,
    return
  }
}

</mosaic_0001>

<llo_original>
// kernel: lstm_model_forward.1
$region0: #{lstm_model_forward.1}
  #allocation0 [shape = 'u32[]', space=smem, size = 0x4, offset = 0x4, fixed_abs, tag = 'smem constant byte address 0x4 - core index']
  #allocation1 [shape = 'u32[144,128]{1,0:T(1,128)}', space=vmem, size = 0x12000, scoped, tag = 'internal scratch']
  #allocation2 [shape = 'bf16[16,32]{1,0:T(16,128)(2,1)}', space=vmem, size = 0x1000, scoped, tag = 'scratch operand']
  %s0 = inlined_call_operand.vmem [shape: bf16[16,16], index: 0, kind: input, shape index: {}]
  %s1 = inlined_call_operand.vmem [shape: bf16[16,128], index: 1, kind: input, shape index: {}]
  %s2 = inlined_call_operand.vmem [shape: bf16[32,128], index: 2, kind: input, shape index: {}]
  %s3 = inlined_call_operand.vmem [shape: f32[1,128], index: 3, kind: input, shape index: {}]
  %s4 = inlined_call_operand.vmem [shape: bf16[32,128], index: 4, kind: input, shape index: {}]
  %s5 = inlined_call_operand.vmem [shape: bf16[32,128], index: 5, kind: input, shape index: {}]
  %s6 = inlined_call_operand.vmem [shape: f32[1,128], index: 6, kind: input, shape index: {}]
  %s7 = inlined_call_operand.vmem [shape: f32[1,32], index: 7, kind: input, shape index: {}]
  %s8 = inlined_call_operand.vmem [shape: f32[1,32], index: 8, kind: input, shape index: {}]
  %s9 = inlined_call_operand.vmem [shape: f32[32,4], index: 9, kind: input, shape index: {}]
  %s10 = inlined_call_operand.vmem [shape: f32[1,4], index: 10, kind: input, shape index: {}]
  %s11 = inlined_call_operand.hbm [shape: f32[2,4], index: 11, kind: output, shape index: {}]
  %s12 = sld [smem:[#allocation0]]
  $region54: #{lstm_model_forward.1} parent=0
    _
  %s14 = ssub.s32 1, %s12
  %s15 = scalar_select 0, %s14, %s12
  $region1: #{lstm_model_forward.1} parent=0
    #allocation3 [shape = 'u8[1024]{0}', space=vmem, size = 0x400, scoped, tag = 'output window, operand 0, single buffered']
    #allocation4 [shape = 's32[1]{0}', space=sflag, size = 0x4, scoped, tag = 'scoped memory for lstm_model_forward.1']
    %16 = vsyncpa [#allocation4], 0
    // Predicated region
    $region2: #{lstm_model_forward.1} parent=1 // pred_check
      _
    $region3: #{lstm_model_forward.1} parent=1 // pred_check_branch
      %18 = sbr.rel (0) target = $region5
    $region4: #{lstm_model_forward.1} parent=1 // pred_region
      _
    $region5: #{lstm_model_forward.1} parent=1 // pred_fallthru
      _
    // Predicated region
    $region6: #{lstm_model_forward.1} parent=1 // pred_check
      _
    $region7: #{lstm_model_forward.1} parent=1 // pred_check_branch
      %20 = sbr.rel (0) target = $region9
    $region8: #{lstm_model_forward.1} parent=1 // pred_region
      _
    $region9: #{lstm_model_forward.1} parent=1 // pred_fallthru
      _
    // Predicated region
    $region10: #{lstm_model_forward.1} parent=1 // pred_check
      _
    $region11: #{lstm_model_forward.1} parent=1 // pred_check_branch
      %22 = sbr.rel (0) target = $region13
    $region12: #{lstm_model_forward.1} parent=1 // pred_region
      _
    $region13: #{lstm_model_forward.1} parent=1 // pred_fallthru
      _
    // Predicated region
    $region14: #{lstm_model_forward.1} parent=1 // pred_check
      _
    $region15: #{lstm_model_forward.1} parent=1 // pred_check_branch
      %24 = sbr.rel (0) target = $region17
    $region16: #{lstm_model_forward.1} parent=1 // pred_region
      _
    $region17: #{lstm_model_forward.1} parent=1 // pred_fallthru
      _
    // Predicated region
    $region18: #{lstm_model_forward.1} parent=1 // pred_check
      _
    $region19: #{lstm_model_forward.1} parent=1 // pred_check_branch
      %26 = sbr.rel (0) target = $region21
    $region20: #{lstm_model_forward.1} parent=1 // pred_region
      _
    $region21: #{lstm_model_forward.1} parent=1 // pred_fallthru
      _
    // Predicated region
    $region22: #{lstm_model_forward.1} parent=1 // pred_check
      _
    $region23: #{lstm_model_forward.1} parent=1 // pred_check_branch
      %28 = sbr.rel (0) target = $region25
    $region24: #{lstm_model_forward.1} parent=1 // pred_region
      _
    $region25: #{lstm_model_forward.1} parent=1 // pred_fallthru
      _
    // Predicated region
    $region26: #{lstm_model_forward.1} parent=1 // pred_check
      _
    $region27: #{lstm_model_forward.1} parent=1 // pred_check_branch
      %30 = sbr.rel (0) target = $region29
    $region28: #{lstm_model_forward.1} parent=1 // pred_region
      _
    $region29: #{lstm_model_forward.1} parent=1 // pred_fallthru
      _
    // Predicated region
    $region30: #{lstm_model_forward.1} parent=1 // pred_check
      _
    $region31: #{lstm_model_forward.1} parent=1 // pred_check_branch
      %32 = sbr.rel (0) target = $region33
    $region32: #{lstm_model_forward.1} parent=1 // pred_region
      _
    $region33: #{lstm_model_forward.1} parent=1 // pred_fallthru
      _
    // Predicated region
    $region34: #{lstm_model_forward.1} parent=1 // pred_check
      _
    $region35: #{lstm_model_forward.1} parent=1 // pred_check_branch
      %34 = sbr.rel (0) target = $region37
    $region36: #{lstm_model_forward.1} parent=1 // pred_region
      _
    $region37: #{lstm_model_forward.1} parent=1 // pred_fallthru
      _
    // Predicated region
    $region38: #{lstm_model_forward.1} parent=1 // pred_check
      _
    $region39: #{lstm_model_forward.1} parent=1 // pred_check_branch
      %36 = sbr.rel (0) target = $region41
    $region40: #{lstm_model_forward.1} parent=1 // pred_region
      _
    $region41: #{lstm_model_forward.1} parent=1 // pred_fallthru
      _
    // Predicated region
    $region42: #{lstm_model_forward.1} parent=1 // pred_check
      _
    $region43: #{lstm_model_forward.1} parent=1 // pred_check_branch
      %38 = sbr.rel (0) target = $region45
    $region44: #{lstm_model_forward.1} parent=1 // pred_region
      _
    $region45: #{lstm_model_forward.1} parent=1 // pred_fallthru
      _
    %v40 = vld [vmem:[%s1] sm:$0xf]
    %v41 = vld [vmem:[%s1 + $0x4] sm:$0xf]
    %v42 = vld [vmem:[%s2] sm:$0xf]
    %v43 = vld [vmem:[%s2 + $0x4] sm:$0xf]
    %v44 = vld [vmem:[%s2 + $0x8] sm:$0xf]
    %v45 = vld [vmem:[%s2 + $0xc] sm:$0xf]
    %v46 = vld [vmem:[%s3] sm:$0x1]
    %v47 = vld [vmem:[%s0] sm:$0xf]
    %v48 = vld [vmem:[%s0 + $0x4] sm:$0xf]
    %v50 = vlaneseq
    %v51 = vshrl.u32 %v50, 7
    %v52 = vsub.s32 0, %v51
    %v53 = vrot.slane %v46, %v52
    %v57 = vunpack.c.l.b16 %v47
    %v58 = vunpack.c.l.b16 %v48
    %v59 = vpack.c.b16 %v58, %v57
    %v62 = vunpack.c.l.b16 %v40
    %v63 = vunpack.c.l.b16 %v41
    %v64 = vpack.c.b16 %v63, %v62
    %vm66 = vcmask 130048
    %v68 = vsel %vm66, %v59, 0
    %70 = vmatprep.subr.bf16.mxu0 0
    %71 = vmatpush1.bf16.msra.mxu0 %v64
    %72 = vmatprep.subr.bf16.mxu0 0
    %73 = vmatpush1.bf16.msra.mxu0 0
    %74 = vmatprep.subr.bf16.mxu0 0
    %75 = vmatpush1.bf16.msra.mxu0 0
    %76 = vmatprep.subr.bf16.mxu0 0
    %77 = vmatpush1.bf16.msra.mxu0 0
    %78 = vmatprep.subr.bf16.mxu0 0
    %79 = vmatpush1.bf16.msra.mxu0 0
    %80 = vmatprep.subr.bf16.mxu0 0
    %81 = vmatpush1.bf16.msra.mxu0 0
    %82 = vmatprep.subr.bf16.mxu0 0
    %83 = vmatpush1.bf16.msra.mxu0 0
    %84 = vmatprep.subr.bf16.mxu0 0
    %85 = vmatpush1.bf16.msra.mxu0 0
    %86 = vmatprep.subr.bf16.mxu0 0
    %87 = vmatpush1.bf16.msra.mxu0 0
    %88 = vmatprep.subr.bf16.mxu0 0
    %89 = vmatpush1.bf16.msra.mxu0 0
    %90 = vmatprep.subr.bf16.mxu0 0
    %91 = vmatpush1.bf16.msra.mxu0 0
    %92 = vmatprep.subr.bf16.mxu0 0
    %93 = vmatpush1.bf16.msra.mxu0 0
    %94 = vmatprep.subr.bf16.mxu0 0
    %95 = vmatpush1.bf16.msra.mxu0 0
    %96 = vmatprep.subr.bf16.mxu0 0
    %97 = vmatpush1.bf16.msra.mxu0 0
    %98 = vmatprep.subr.bf16.mxu0 0
    %99 = vmatpush1.bf16.msra.mxu0 0
    %100 = vmatprep.subr.bf16.mxu0 0
    %101 = vmatpush1.bf16.msra.mxu0 0
    %102 = vmatprep.mubr.bf16.mxu0 0
    %103 = vmatmul.mubr.bf16.gmra.mrb[0].mxu0 %v68
    %v104 = vpop.f32.mrb[0].mxu0
    %v105 = vadd.f32 %v53, %v104
    %v106 = vpop.f32.mrb[0].mxu0
    %v107 = vpop.f32.mrb[0].mxu0
    %v108 = vadd.f32 %v53, %v107
    %v109 = vpop.f32.mrb[0].mxu0
    %110 = vdwg.mxu0
    %v115 = vunpack.c.l.b16 %v42
    %v116 = vunpack.c.l.b16 %v43
    %v117 = vunpack.c.l.b16 %v44
    %v118 = vunpack.c.l.b16 %v45
    %v119 = vpack.c.b16 %v116, %v115
    %v120 = vpack.c.b16 %v118, %v117
    %vm123 = vcmask 261120
    %v125 = vsel %vm123, 0, 0
    %127 = vmatprep.subr.bf16.mxu0 0
    %128 = vmatpush1.bf16.msra.mxu0 %v119
    %129 = vmatprep.subr.bf16.mxu0 0
    %130 = vmatpush1.bf16.msra.mxu0 %v120
    %131 = vmatprep.subr.bf16.mxu0 0
    %132 = vmatpush1.bf16.msra.mxu0 0
    %133 = vmatprep.subr.bf16.mxu0 0
    %134 = vmatpush1.bf16.msra.mxu0 0
    %135 = vmatprep.subr.bf16.mxu0 0
    %136 = vmatpush1.bf16.msra.mxu0 0
    %137 = vmatprep.subr.bf16.mxu0 0
    %138 = vmatpush1.bf16.msra.mxu0 0
    %139 = vmatprep.subr.bf16.mxu0 0
    %140 = vmatpush1.bf16.msra.mxu0 0
    %141 = vmatprep.subr.bf16.mxu0 0
    %142 = vmatpush1.bf16.msra.mxu0 0
    %143 = vmatprep.subr.bf16.mxu0 0
    %144 = vmatpush1.bf16.msra.mxu0 0
    %145 = vmatprep.subr.bf16.mxu0 0
    %146 = vmatpush1.bf16.msra.mxu0 0
    %147 = vmatprep.subr.bf16.mxu0 0
    %148 = vmatpush1.bf16.msra.mxu0 0
    %149 = vmatprep.subr.bf16.mxu0 0
    %150 = vmatpush1.bf16.msra.mxu0 0
    %151 = vmatprep.subr.bf16.mxu0 0
    %152 = vmatpush1.bf16.msra.mxu0 0
    %153 = vmatprep.subr.bf16.mxu0 0
    %154 = vmatpush1.bf16.msra.mxu0 0
    %155 = vmatprep.subr.bf16.mxu0 0
    %156 = vmatpush1.bf16.msra.mxu0 0
    %157 = vmatprep.subr.bf16.mxu0 0
    %158 = vmatpush1.bf16.msra.mxu0 0
    %159 = vmatprep.mubr.bf16.mxu0 0
    %160 = vmatmul.mubr.bf16.gmra.mrb[0].mxu0 %v125
    %v161 = vpop.f32.mrb[0].mxu0
    %v162 = vadd.f32 0.0, %v161
    %v163 = vpop.f32.mrb[0].mxu0
    %v164 = vpop.f32.mrb[0].mxu0
    %v165 = vpop.f32.mrb[0].mxu0
    %166 = vdwg.mxu0
    %v167 = vadd.f32 %v105, %v162
    %v168 = vxor.u32 %v167, 2147483648
    %v169 = vmul.f32 %v168, 1.442695
    %v170 = vpow.pop %v169
    %v171 = vadd.f32 %v170, 1.0
    %v172 = vrcp.pop %v171
    %v173 = vmul.f32 1.0, %v172
    %v174 = vmul.f32 %v173, 2.0
    %v175 = vsub.f32 %v174, 1.0
    %v176 = vmul.f32 %v173, 0.0
    %178 = vrot.lane.b32.xlu0 %v175, 64
    %v179 = vpop.permute.xlu0 %178
    %v181 = vmul.f32 %v173, %v179
    %183 = vrot.lane.b32.xlu0 %v181, 32
    %v184 = vpop.permute.xlu0 %183
    %v186 = vadd.f32 %v176, %v184
    %v187 = vtanh.pop %v186
    %189 = vrot.lane.b32.xlu0 %v187, 64
    %v190 = vpop.permute.xlu0 %189
    %v192 = vmul.f32 %v173, %v190
    %v193 = vpack.c.bf16 %v192, %v192
    %195 = vrot.lane.b32.xlu0 %v193, 32
    %v196 = vpop.permute.xlu0 %195
    %vm198 = vcmask 253952
    %199 = vst.msk [vmem:[#allocation2] sm:$0x1] %vm198, %v196
    %v201 = vsel %vm123, %v196, 0
    %203 = vmatprep.subr.bf16.mxu0 0
    %204 = vmatpush1.bf16.msra.mxu0 %v119
    %205 = vmatprep.subr.bf16.mxu0 0
    %206 = vmatpush1.bf16.msra.mxu0 %v120
    %207 = vmatprep.subr.bf16.mxu0 0
    %208 = vmatpush1.bf16.msra.mxu0 0
    %209 = vmatprep.subr.bf16.mxu0 0
    %210 = vmatpush1.bf16.msra.mxu0 0
    %211 = vmatprep.subr.bf16.mxu0 0
    %212 = vmatpush1.bf16.msra.mxu0 0
    %213 = vmatprep.subr.bf16.mxu0 0
    %214 = vmatpush1.bf16.msra.mxu0 0
    %215 = vmatprep.subr.bf16.mxu0 0
    %216 = vmatpush1.bf16.msra.mxu0 0
    %217 = vmatprep.subr.bf16.mxu0 0
    %218 = vmatpush1.bf16.msra.mxu0 0
    %219 = vmatprep.subr.bf16.mxu0 0
    %220 = vmatpush1.bf16.msra.mxu0 0
    %221 = vmatprep.subr.bf16.mxu0 0
    %222 = vmatpush1.bf16.msra.mxu0 0
    %223 = vmatprep.subr.bf16.mxu0 0
    %224 = vmatpush1.bf16.msra.mxu0 0
    %225 = vmatprep.subr.bf16.mxu0 0
    %226 = vmatpush1.bf16.msra.mxu0 0
    %227 = vmatprep.subr.bf16.mxu0 0
    %228 = vmatpush1.bf16.msra.mxu0 0
    %229 = vmatprep.subr.bf16.mxu0 0
    %230 = vmatpush1.bf16.msra.mxu0 0
    %231 = vmatprep.subr.bf16.mxu0 0
    %232 = vmatpush1.bf16.msra.mxu0 0
    %233 = vmatprep.subr.bf16.mxu0 0
    %234 = vmatpush1.bf16.msra.mxu0 0
    %235 = vmatprep.mubr.bf16.mxu0 0
    %236 = vmatmul.mubr.bf16.gmra.mrb[0].mxu0 %v201
    %v237 = vpop.f32.mrb[0].mxu0
    %v238 = vadd.f32 0.0, %v237
    %v239 = vpop.f32.mrb[0].mxu0
    %v240 = vpop.f32.mrb[0].mxu0
    %v241 = vpop.f32.mrb[0].mxu0
    %242 = vdwg.mxu0
    %v244 = vrot.slane %v238, 6
    %v246 = vadd.f32 %v105, %v244
    %v247 = vxor.u32 %v246, 2147483648
    %v248 = vmul.f32 %v247, 1.442695
    %v249 = vpow.pop %v248
    %v250 = vadd.f32 %v249, 1.0
    %v251 = vrcp.pop %v250
    %v252 = vmul.f32 1.0, %v251
    %v253 = vmul.f32 %v252, 2.0
    %v254 = vsub.f32 %v253, 1.0
    %v256 = vrot.slane %v186, 6
    %v258 = vmul.f32 %v252, %v256
    %260 = vrot.lane.b32.xlu0 %v254, 64
    %v261 = vpop.permute.xlu0 %260
    %v263 = vmul.f32 %v252, %v261
    %265 = vrot.lane.b32.xlu0 %v263, 32
    %v266 = vpop.permute.xlu0 %265
    %v268 = vadd.f32 %v258, %v266
    %v269 = vtanh.pop %v268
    %271 = vrot.lane.b32.xlu0 %v269, 64
    %v272 = vpop.permute.xlu0 %271
    %v274 = vmul.f32 %v252, %v272
    %v275 = vpack.c.bf16 %v274, %v274
    %277 = vrot.lane.b32.xlu0 %v275, 32
    %v278 = vpop.permute.xlu0 %277
    %vm280 = vcmask 254977
    %281 = vst.msk [vmem:[#allocation2] sm:$0x2] %vm280, %v278
    %v282 = vrot.slane %v275, 1
    %283 = vrot.lane.b32.xlu0 %v282, 32
    %v284 = vpop.permute.xlu0 %283
    %v286 = vsel %vm123, %v284, 0
    %288 = vmatprep.subr.bf16.mxu0 0
    %289 = vmatpush1.bf16.msra.mxu0 %v119
    %290 = vmatprep.subr.bf16.mxu0 0
    %291 = vmatpush1.bf16.msra.mxu0 %v120
    %292 = vmatprep.subr.bf16.mxu0 0
    %293 = vmatpush1.bf16.msra.mxu0 0
    %294 = vmatprep.subr.bf16.mxu0 0
    %295 = vmatpush1.bf16.msra.mxu0 0
    %296 = vmatprep.subr.bf16.mxu0 0
    %297 = vmatpush1.bf16.msra.mxu0 0
    %298 = vmatprep.subr.bf16.mxu0 0
    %299 = vmatpush1.bf16.msra.mxu0 0
    %300 = vmatprep.subr.bf16.mxu0 0
    %301 = vmatpush1.bf16.msra.mxu0 0
    %302 = vmatprep.subr.bf16.mxu0 0
    %303 = vmatpush1.bf16.msra.mxu0 0
    %304 = vmatprep.subr.bf16.mxu0 0
    %305 = vmatpush1.bf16.msra.mxu0 0
    %306 = vmatprep.subr.bf16.mxu0 0
    %307 = vmatpush1.bf16.msra.mxu0 0
    %308 = vmatprep.subr.bf16.mxu0 0
    %309 = vmatpush1.bf16.msra.mxu0 0
    %310 = vmatprep.subr.bf16.mxu0 0
    %311 = vmatpush1.bf16.msra.mxu0 0
    %312 = vmatprep.subr.bf16.mxu0 0
    %313 = vmatpush1.bf16.msra.mxu0 0
    %314 = vmatprep.subr.bf16.mxu0 0
    %315 = vmatpush1.bf16.msra.mxu0 0
    %316 = vmatprep.subr.bf16.mxu0 0
    %317 = vmatpush1.bf16.msra.mxu0 0
    %318 = vmatprep.subr.bf16.mxu0 0
    %319 = vmatpush1.bf16.msra.mxu0 0
    %320 = vmatprep.mubr.bf16.mxu0 0
    %321 = vmatmul.mubr.bf16.gmra.mrb[0].mxu0 %v286
    %v322 = vpop.f32.mrb[0].mxu0
    %v323 = vadd.f32 0.0, %v322
    %v324 = vpop.f32.mrb[0].mxu0
    %v325 = vpop.f32.mrb[0].mxu0
    %v326 = vpop.f32.mrb[0].mxu0
    %327 = vdwg.mxu0
    %v329 = vrot.slane %v323, 4
    %v331 = vadd.f32 %v105, %v329
    %v332 = vxor.u32 %v331, 2147483648
    %v333 = vmul.f32 %v332, 1.442695
    %v334 = vpow.pop %v333
    %v335 = vadd.f32 %v334, 1.0
    %v336 = vrcp.pop %v335
    %v337 = vmul.f32 1.0, %v336
    %v338 = vmul.f32 %v337, 2.0
    %v339 = vsub.f32 %v338, 1.0
    %v341 = vrot.slane %v268, 6
    %v343 = vmul.f32 %v337, %v341
    %345 = vrot.lane.b32.xlu0 %v339, 64
    %v346 = vpop.permute.xlu0 %345
    %v348 = vmul.f32 %v337, %v346
    %350 = vrot.lane.b32.xlu0 %v348, 32
    %v351 = vpop.permute.xlu0 %350
    %v353 = vadd.f32 %v343, %v351
    %v354 = vtanh.pop %v353
    %356 = vrot.lane.b32.xlu0 %v354, 64
    %v357 = vpop.permute.xlu0 %356
    %v359 = vmul.f32 %v337, %v357
    %v360 = vpack.c.bf16 %v359, %v359
    %362 = vrot.lane.b32.xlu0 %v360, 32
    %v363 = vpop.permute.xlu0 %362
    %vm365 = vcmask 256002
    %366 = vst.msk [vmem:[#allocation2] sm:$0x4] %vm365, %v363
    %v367 = vrot.slane %v360, 2
    %368 = vrot.lane.b32.xlu0 %v367, 32
    %v369 = vpop.permute.xlu0 %368
    %v371 = vsel %vm123, %v369, 0
    %373 = vmatprep.subr.bf16.mxu0 0
    %374 = vmatpush1.bf16.msra.mxu0 %v119
    %375 = vmatprep.subr.bf16.mxu0 0
    %376 = vmatpush1.bf16.msra.mxu0 %v120
    %377 = vmatprep.subr.bf16.mxu0 0
    %378 = vmatpush1.bf16.msra.mxu0 0
    %379 = vmatprep.subr.bf16.mxu0 0
    %380 = vmatpush1.bf16.msra.mxu0 0
    %381 = vmatprep.subr.bf16.mxu0 0
    %382 = vmatpush1.bf16.msra.mxu0 0
    %383 = vmatprep.subr.bf16.mxu0 0
    %384 = vmatpush1.bf16.msra.mxu0 0
    %385 = vmatprep.subr.bf16.mxu0 0
    %386 = vmatpush1.bf16.msra.mxu0 0
    %387 = vmatprep.subr.bf16.mxu0 0
    %388 = vmatpush1.bf16.msra.mxu0 0
    %389 = vmatprep.subr.bf16.mxu0 0
    %390 = vmatpush1.bf16.msra.mxu0 0
    %391 = vmatprep.subr.bf16.mxu0 0
    %392 = vmatpush1.bf16.msra.mxu0 0
    %393 = vmatprep.subr.bf16.mxu0 0
    %394 = vmatpush1.bf16.msra.mxu0 0
    %395 = vmatprep.subr.bf16.mxu0 0
    %396 = vmatpush1.bf16.msra.mxu0 0
    %397 = vmatprep.subr.bf16.mxu0 0
    %398 = vmatpush1.bf16.msra.mxu0 0
    %399 = vmatprep.subr.bf16.mxu0 0
    %400 = vmatpush1.bf16.msra.mxu0 0
    %401 = vmatprep.subr.bf16.mxu0 0
    %402 = vmatpush1.bf16.msra.mxu0 0
    %403 = vmatprep.subr.bf16.mxu0 0
    %404 = vmatpush1.bf16.msra.mxu0 0
    %405 = vmatprep.mubr.bf16.mxu0 0
    %406 = vmatmul.mubr.bf16.gmra.mrb[0].mxu0 %v371
    %v407 = vpop.f32.mrb[0].mxu0
    %v408 = vadd.f32 0.0, %v407
    %v409 = vpop.f32.mrb[0].mxu0
    %v410 = vpop.f32.mrb[0].mxu0
    %v411 = vpop.f32.mrb[0].mxu0
    %412 = vdwg.mxu0
    %v414 = vrot.slane %v408, 2
    %v416 = vadd.f32 %v105, %v414
    %v417 = vxor.u32 %v416, 2147483648
    %v418 = vmul.f32 %v417, 1.442695
    %v419 = vpow.pop %v418
    %v420 = vadd.f32 %v419, 1.0
    %v421 = vrcp.pop %v420
    %v422 = vmul.f32 1.0, %v421
    %v423 = vmul.f32 %v422, 2.0
    %v424 = vsub.f32 %v423, 1.0
    %v426 = vrot.slane %v353, 6
    %v428 = vmul.f32 %v422, %v426
    %430 = vrot.lane.b32.xlu0 %v424, 64
    %v431 = vpop.permute.xlu0 %430
    %v433 = vmul.f32 %v422, %v431
    %435 = vrot.lane.b32.xlu0 %v433, 32
    %v436 = vpop.permute.xlu0 %435
    %v438 = vadd.f32 %v428, %v436
    %v439 = vtanh.pop %v438
    %441 = vrot.lane.b32.xlu0 %v439, 64
    %v442 = vpop.permute.xlu0 %441
    %v444 = vmul.f32 %v422, %v442
    %v445 = vpack.c.bf16 %v444, %v444
    %447 = vrot.lane.b32.xlu0 %v445, 32
    %v448 = vpop.permute.xlu0 %447
    %vm450 = vcmask 257027
    %451 = vst.msk [vmem:[#allocation2] sm:$0x8] %vm450, %v448
    %v452 = vrot.slane %v445, 3
    %453 = vrot.lane.b32.xlu0 %v452, 32
    %v454 = vpop.permute.xlu0 %453
    %v456 = vsel %vm123, %v454, 0
    %458 = vmatprep.subr.bf16.mxu0 0
    %459 = vmatpush1.bf16.msra.mxu0 %v119
    %460 = vmatprep.subr.bf16.mxu0 0
    %461 = vmatpush1.bf16.msra.mxu0 %v120
    %462 = vmatprep.subr.bf16.mxu0 0
    %463 = vmatpush1.bf16.msra.mxu0 0
    %464 = vmatprep.subr.bf16.mxu0 0
    %465 = vmatpush1.bf16.msra.mxu0 0
    %466 = vmatprep.subr.bf16.mxu0 0
    %467 = vmatpush1.bf16.msra.mxu0 0
    %468 = vmatprep.subr.bf16.mxu0 0
    %469 = vmatpush1.bf16.msra.mxu0 0
    %470 = vmatprep.subr.bf16.mxu0 0
    %471 = vmatpush1.bf16.msra.mxu0 0
    %472 = vmatprep.subr.bf16.mxu0 0
    %473 = vmatpush1.bf16.msra.mxu0 0
    %474 = vmatprep.subr.bf16.mxu0 0
    %475 = vmatpush1.bf16.msra.mxu0 0
    %476 = vmatprep.subr.bf16.mxu0 0
    %477 = vmatpush1.bf16.msra.mxu0 0
    %478 = vmatprep.subr.bf16.mxu0 0
    %479 = vmatpush1.bf16.msra.mxu0 0
    %480 = vmatprep.subr.bf16.mxu0 0
    %481 = vmatpush1.bf16.msra.mxu0 0
    %482 = vmatprep.subr.bf16.mxu0 0
    %483 = vmatpush1.bf16.msra.mxu0 0
    %484 = vmatprep.subr.bf16.mxu0 0
    %485 = vmatpush1.bf16.msra.mxu0 0
    %486 = vmatprep.subr.bf16.mxu0 0
    %487 = vmatpush1.bf16.msra.mxu0 0
    %488 = vmatprep.subr.bf16.mxu0 0
    %489 = vmatpush1.bf16.msra.mxu0 0
    %490 = vmatprep.mubr.bf16.mxu0 0
    %491 = vmatmul.mubr.bf16.gmra.mrb[0].mxu0 %v456
    %v492 = vpop.f32.mrb[0].mxu0
    %v493 = vadd.f32 0.0, %v492
    %v494 = vpop.f32.mrb[0].mxu0
    %v495 = vpop.f32.mrb[0].mxu0
    %v496 = vpop.f32.mrb[0].mxu0
    %497 = vdwg.mxu0
    %v498 = vadd.f32 %v108, %v493
    %v499 = vxor.u32 %v498, 2147483648
    %v500 = vmul.f32 %v499, 1.442695
    %v501 = vpow.pop %v500
    %v502 = vadd.f32 %v501, 1.0
    %v503 = vrcp.pop %v502
    %v504 = vmul.f32 1.0, %v503
    %v505 = vmul.f32 %v504, 2.0
    %v506 = vsub.f32 %v505, 1.0
    %v508 = vrot.slane %v438, 6
    %v510 = vmul.f32 %v504, %v508
    %512 = vrot.lane.b32.xlu0 %v506, 64
    %v513 = vpop.permute.xlu0 %512
    %v515 = vmul.f32 %v504, %v513
    %517 = vrot.lane.b32.xlu0 %v515, 32
    %v518 = vpop.permute.xlu0 %517
    %v520 = vadd.f32 %v510, %v518
    %v521 = vtanh.pop %v520
    %523 = vrot.lane.b32.xlu0 %v521, 64
    %v524 = vpop.permute.xlu0 %523
    %v526 = vmul.f32 %v504, %v524
    %v527 = vpack.c.bf16 %v526, %v526
    %v529 = vrot.slane %v527, 4
    %530 = vrot.lane.b32.xlu0 %v529, 32
    %v531 = vpop.permute.xlu0 %530
    %vm533 = vcmask 258052
    %534 = vst.msk [vmem:[#allocation2] sm:$0x10] %vm533, %v531
    %535 = vrot.lane.b32.xlu0 %v527, 32
    %v536 = vpop.permute.xlu0 %535
    %v538 = vsel %vm123, %v536, 0
    %540 = vmatprep.subr.bf16.mxu0 0
    %541 = vmatpush1.bf16.msra.mxu0 %v119
    %542 = vmatprep.subr.bf16.mxu0 0
    %543 = vmatpush1.bf16.msra.mxu0 %v120
    %544 = vmatprep.subr.bf16.mxu0 0
    %545 = vmatpush1.bf16.msra.mxu0 0
    %546 = vmatprep.subr.bf16.mxu0 0
    %547 = vmatpush1.bf16.msra.mxu0 0
    %548 = vmatprep.subr.bf16.mxu0 0
    %549 = vmatpush1.bf16.msra.mxu0 0
    %550 = vmatprep.subr.bf16.mxu0 0
    %551 = vmatpush1.bf16.msra.mxu0 0
    %552 = vmatprep.subr.bf16.mxu0 0
    %553 = vmatpush1.bf16.msra.mxu0 0
    %554 = vmatprep.subr.bf16.mxu0 0
    %555 = vmatpush1.bf16.msra.mxu0 0
    %556 = vmatprep.subr.bf16.mxu0 0
    %557 = vmatpush1.bf16.msra.mxu0 0
    %558 = vmatprep.subr.bf16.mxu0 0
    %559 = vmatpush1.bf16.msra.mxu0 0
    %560 = vmatprep.subr.bf16.mxu0 0
    %561 = vmatpush1.bf16.msra.mxu0 0
    %562 = vmatprep.subr.bf16.mxu0 0
    %563 = vmatpush1.bf16.msra.mxu0 0
    %564 = vmatprep.subr.bf16.mxu0 0
    %565 = vmatpush1.bf16.msra.mxu0 0
    %566 = vmatprep.subr.bf16.mxu0 0
    %567 = vmatpush1.bf16.msra.mxu0 0
    %568 = vmatprep.subr.bf16.mxu0 0
    %569 = vmatpush1.bf16.msra.mxu0 0
    %570 = vmatprep.subr.bf16.mxu0 0
    %571 = vmatpush1.bf16.msra.mxu0 0
    %572 = vmatprep.mubr.bf16.mxu0 0
    %573 = vmatmul.mubr.bf16.gmra.mrb[0].mxu0 %v538
    %v574 = vpop.f32.mrb[0].mxu0
    %v575 = vadd.f32 0.0, %v574
    %v576 = vpop.f32.mrb[0].mxu0
    %v577 = vpop.f32.mrb[0].mxu0
    %v578 = vpop.f32.mrb[0].mxu0
    %579 = vdwg.mxu0
    %v581 = vrot.slane %v575, 6
    %v583 = vadd.f32 %v108, %v581
    %v584 = vxor.u32 %v583, 2147483648
    %v585 = vmul.f32 %v584, 1.442695
    %v586 = vpow.pop %v585
    %v587 = vadd.f32 %v586, 1.0
    %v588 = vrcp.pop %v587
    %v589 = vmul.f32 1.0, %v588
    %v590 = vmul.f32 %v589, 2.0
    %v591 = vsub.f32 %v590, 1.0
    %v593 = vrot.slane %v520, 6
    %v595 = vmul.f32 %v589, %v593
    %597 = vrot.lane.b32.xlu0 %v591, 64
    %v598 = vpop.permute.xlu0 %597
    %v600 = vmul.f32 %v589, %v598
    %602 = vrot.lane.b32.xlu0 %v600, 32
    %v603 = vpop.permute.xlu0 %602
    %v605 = vadd.f32 %v595, %v603
    %v606 = vtanh.pop %v605
    %608 = vrot.lane.b32.xlu0 %v606, 64
    %v609 = vpop.permute.xlu0 %608
    %v611 = vmul.f32 %v589, %v609
    %v612 = vpack.c.bf16 %v611, %v611
    %v614 = vrot.slane %v612, 4
    %615 = vrot.lane.b32.xlu0 %v614, 32
    %v616 = vpop.permute.xlu0 %615
    %vm618 = vcmask 259077
    %619 = vst.msk [vmem:[#allocation2] sm:$0x20] %vm618, %v616
    %v620 = vrot.slane %v612, 1
    %621 = vrot.lane.b32.xlu0 %v620, 32
    %v622 = vpop.permute.xlu0 %621
    %v624 = vsel %vm123, %v622, 0
    %626 = vmatprep.subr.bf16.mxu0 0
    %627 = vmatpush1.bf16.msra.mxu0 %v119
    %628 = vmatprep.subr.bf16.mxu0 0
    %629 = vmatpush1.bf16.msra.mxu0 %v120
    %630 = vmatprep.subr.bf16.mxu0 0
    %631 = vmatpush1.bf16.msra.mxu0 0
    %632 = vmatprep.subr.bf16.mxu0 0
    %633 = vmatpush1.bf16.msra.mxu0 0
    %634 = vmatprep.subr.bf16.mxu0 0
    %635 = vmatpush1.bf16.msra.mxu0 0
    %636 = vmatprep.subr.bf16.mxu0 0
    %637 = vmatpush1.bf16.msra.mxu0 0
    %638 = vmatprep.subr.bf16.mxu0 0
    %639 = vmatpush1.bf16.msra.mxu0 0
    %640 = vmatprep.subr.bf16.mxu0 0
    %641 = vmatpush1.bf16.msra.mxu0 0
    %642 = vmatprep.subr.bf16.mxu0 0
    %643 = vmatpush1.bf16.msra.mxu0 0
    %644 = vmatprep.subr.bf16.mxu0 0
    %645 = vmatpush1.bf16.msra.mxu0 0
    %646 = vmatprep.subr.bf16.mxu0 0
    %647 = vmatpush1.bf16.msra.mxu0 0
    %648 = vmatprep.subr.bf16.mxu0 0
    %649 = vmatpush1.bf16.msra.mxu0 0
    %650 = vmatprep.subr.bf16.mxu0 0
    %651 = vmatpush1.bf16.msra.mxu0 0
    %652 = vmatprep.subr.bf16.mxu0 0
    %653 = vmatpush1.bf16.msra.mxu0 0
    %654 = vmatprep.subr.bf16.mxu0 0
    %655 = vmatpush1.bf16.msra.mxu0 0
    %656 = vmatprep.subr.bf16.mxu0 0
    %657 = vmatpush1.bf16.msra.mxu0 0
    %658 = vmatprep.mubr.bf16.mxu0 0
    %659 = vmatmul.mubr.bf16.gmra.mrb[0].mxu0 %v624
    %v660 = vpop.f32.mrb[0].mxu0
    %v661 = vadd.f32 0.0, %v660
    %v662 = vpop.f32.mrb[0].mxu0
    %v663 = vpop.f32.mrb[0].mxu0
    %v664 = vpop.f32.mrb[0].mxu0
    %665 = vdwg.mxu0
    %v667 = vrot.slane %v661, 4
    %v669 = vadd.f32 %v108, %v667
    %v670 = vxor.u32 %v669, 2147483648
    %v671 = vmul.f32 %v670, 1.442695
    %v672 = vpow.pop %v671
    %v673 = vadd.f32 %v672, 1.0
    %v674 = vrcp.pop %v673
    %v675 = vmul.f32 1.0, %v674
    %v676 = vmul.f32 %v675, 2.0
    %v677 = vsub.f32 %v676, 1.0
    %v679 = vrot.slane %v605, 6
    %v681 = vmul.f32 %v675, %v679
    %683 = vrot.lane.b32.xlu0 %v677, 64
    %v684 = vpop.permute.xlu0 %683
    %v686 = vmul.f32 %v675, %v684
    %688 = vrot.lane.b32.xlu0 %v686, 32
    %v689 = vpop.permute.xlu0 %688
    %v691 = vadd.f32 %v681, %v689
    %v692 = vtanh.pop %v691
    %694 = vrot.lane.b32.xlu0 %v692, 64
    %v695 = vpop.permute.xlu0 %694
    %v697 = vmul.f32 %v675, %v695
    %v698 = vpack.c.bf16 %v697, %v697
    %v700 = vrot.slane %v698, 4
    %701 = vrot.lane.b32.xlu0 %v700, 32
    %v702 = vpop.permute.xlu0 %701
    %vm704 = vcmask 260102
    %705 = vst.msk [vmem:[#allocation2] sm:$0x40] %vm704, %v702
    %v706 = vrot.slane %v698, 2
    %707 = vrot.lane.b32.xlu0 %v706, 32
    %v708 = vpop.permute.xlu0 %707
    %v710 = vsel %vm123, %v708, 0
    %712 = vmatprep.subr.bf16.mxu0 0
    %713 = vmatpush1.bf16.msra.mxu0 %v119
    %714 = vmatprep.subr.bf16.mxu0 0
    %715 = vmatpush1.bf16.msra.mxu0 %v120
    %716 = vmatprep.subr.bf16.mxu0 0
    %717 = vmatpush1.bf16.msra.mxu0 0
    %718 = vmatprep.subr.bf16.mxu0 0
    %719 = vmatpush1.bf16.msra.mxu0 0
    %720 = vmatprep.subr.bf16.mxu0 0
    %721 = vmatpush1.bf16.msra.mxu0 0
    %722 = vmatprep.subr.bf16.mxu0 0
    %723 = vmatpush1.bf16.msra.mxu0 0
    %724 = vmatprep.subr.bf16.mxu0 0
    %725 = vmatpush1.bf16.msra.mxu0 0
    %726 = vmatprep.subr.bf16.mxu0 0
    %727 = vmatpush1.bf16.msra.mxu0 0
    %728 = vmatprep.subr.bf16.mxu0 0
    %729 = vmatpush1.bf16.msra.mxu0 0
    %730 = vmatprep.subr.bf16.mxu0 0
    %731 = vmatpush1.bf16.msra.mxu0 0
    %732 = vmatprep.subr.bf16.mxu0 0
    %733 = vmatpush1.bf16.msra.mxu0 0
    %734 = vmatprep.subr.bf16.mxu0 0
    %735 = vmatpush1.bf16.msra.mxu0 0
    %736 = vmatprep.subr.bf16.mxu0 0
    %737 = vmatpush1.bf16.msra.mxu0 0
    %738 = vmatprep.subr.bf16.mxu0 0
    %739 = vmatpush1.bf16.msra.mxu0 0
    %740 = vmatprep.subr.bf16.mxu0 0
    %741 = vmatpush1.bf16.msra.mxu0 0
    %742 = vmatprep.subr.bf16.mxu0 0
    %743 = vmatpush1.bf16.msra.mxu0 0
    %744 = vmatprep.mubr.bf16.mxu0 0
    %745 = vmatmul.mubr.bf16.gmra.mrb[0].mxu0 %v710
    %v746 = vpop.f32.mrb[0].mxu0
    %v747 = vadd.f32 0.0, %v746
    %v748 = vpop.f32.mrb[0].mxu0
    %v749 = vpop.f32.mrb[0].mxu0
    %v750 = vpop.f32.mrb[0].mxu0
    %751 = vdwg.mxu0
    %v753 = vrot.slane %v747, 2
    %v755 = vadd.f32 %v108, %v753
    %v756 = vxor.u32 %v755, 2147483648
    %v757 = vmul.f32 %v756, 1.442695
    %v758 = vpow.pop %v757
    %v759 = vadd.f32 %v758, 1.0
    %v760 = vrcp.pop %v759
    %v761 = vmul.f32 1.0, %v760
    %v762 = vmul.f32 %v761, 2.0
    %v763 = vsub.f32 %v762, 1.0
    %v765 = vrot.slane %v691, 6
    %v767 = vmul.f32 %v761, %v765
    %769 = vrot.lane.b32.xlu0 %v763, 64
    %v770 = vpop.permute.xlu0 %769
    %v772 = vmul.f32 %v761, %v770
    %774 = vrot.lane.b32.xlu0 %v772, 32
    %v775 = vpop.permute.xlu0 %774
    %v777 = vadd.f32 %v767, %v775
    %v778 = vtanh.pop %v777
    %780 = vrot.lane.b32.xlu0 %v778, 64
    %v781 = vpop.permute.xlu0 %780
    %v783 = vmul.f32 %v761, %v781
    %v784 = vpack.c.bf16 %v783, %v783
    %v786 = vrot.slane %v784, 4
    %787 = vrot.lane.b32.xlu0 %v786, 32
    %v788 = vpop.permute.xlu0 %787
    %vm790 = vcmask 261127
    %791 = vst.msk [vmem:[#allocation2] sm:$0x80] %vm790, %v788
    %v792 = vld [vmem:[%s4] sm:$0xf]
    %v793 = vld [vmem:[%s4 + $0x4] sm:$0xf]
    %v794 = vld [vmem:[%s4 + $0x8] sm:$0xf]
    %v795 = vld [vmem:[%s4 + $0xc] sm:$0xf]
    %v796 = vld [vmem:[%s5] sm:$0xf]
    %v797 = vld [vmem:[%s5 + $0x4] sm:$0xf]
    %v798 = vld [vmem:[%s5 + $0x8] sm:$0xf]
    %v799 = vld [vmem:[%s5 + $0xc] sm:$0xf]
    %v800 = vld [vmem:[%s6] sm:$0x1]
    %v801 = vld [vmem:[#allocation2] sm:$0xff]
    %v803 = vlaneseq
    %v804 = vshrl.u32 %v803, 7
    %v805 = vsub.s32 0, %v804
    %v806 = vrot.slane %v800, %v805
    %v812 = vunpack.c.l.b16 %v792
    %v813 = vunpack.c.l.b16 %v793
    %v814 = vunpack.c.l.b16 %v794
    %v815 = vunpack.c.l.b16 %v795
    %v816 = vpack.c.b16 %v813, %v812
    %v817 = vpack.c.b16 %v815, %v814
    %v821 = vsel %vm123, %v801, 0
    %823 = vmatprep.subr.bf16.mxu0 0
    %824 = vmatpush1.bf16.msra.mxu0 %v816
    %825 = vmatprep.subr.bf16.mxu0 0
    %826 = vmatpush1.bf16.msra.mxu0 %v817
    %827 = vmatprep.subr.bf16.mxu0 0
    %828 = vmatpush1.bf16.msra.mxu0 0
    %829 = vmatprep.subr.bf16.mxu0 0
    %830 = vmatpush1.bf16.msra.mxu0 0
    %831 = vmatprep.subr.bf16.mxu0 0
    %832 = vmatpush1.bf16.msra.mxu0 0
    %833 = vmatprep.subr.bf16.mxu0 0
    %834 = vmatpush1.bf16.msra.mxu0 0
    %835 = vmatprep.subr.bf16.mxu0 0
    %836 = vmatpush1.bf16.msra.mxu0 0
    %837 = vmatprep.subr.bf16.mxu0 0
    %838 = vmatpush1.bf16.msra.mxu0 0
    %839 = vmatprep.subr.bf16.mxu0 0
    %840 = vmatpush1.bf16.msra.mxu0 0
    %841 = vmatprep.subr.bf16.mxu0 0
    %842 = vmatpush1.bf16.msra.mxu0 0
    %843 = vmatprep.subr.bf16.mxu0 0
    %844 = vmatpush1.bf16.msra.mxu0 0
    %845 = vmatprep.subr.bf16.mxu0 0
    %846 = vmatpush1.bf16.msra.mxu0 0
    %847 = vmatprep.subr.bf16.mxu0 0
    %848 = vmatpush1.bf16.msra.mxu0 0
    %849 = vmatprep.subr.bf16.mxu0 0
    %850 = vmatpush1.bf16.msra.mxu0 0
    %851 = vmatprep.subr.bf16.mxu0 0
    %852 = vmatpush1.bf16.msra.mxu0 0
    %853 = vmatprep.subr.bf16.mxu0 0
    %854 = vmatpush1.bf16.msra.mxu0 0
    %855 = vmatprep.mubr.bf16.mxu0 0
    %856 = vmatmul.mubr.bf16.gmra.mrb[0].mxu0 %v821
    %v857 = vpop.f32.mrb[0].mxu0
    %v858 = vadd.f32 %v806, %v857
    %v859 = vpop.f32.mrb[0].mxu0
    %v860 = vpop.f32.mrb[0].mxu0
    %v861 = vadd.f32 %v806, %v860
    %v862 = vpop.f32.mrb[0].mxu0
    %863 = vdwg.mxu0
    %v868 = vunpack.c.l.b16 %v796
    %v869 = vunpack.c.l.b16 %v797
    %v870 = vunpack.c.l.b16 %v798
    %v871 = vunpack.c.l.b16 %v799
    %v872 = vpack.c.b16 %v869, %v868
    %v873 = vpack.c.b16 %v871, %v870
    %876 = vmatprep.subr.bf16.mxu0 0
    %877 = vmatpush1.bf16.msra.mxu0 %v872
    %878 = vmatprep.subr.bf16.mxu0 0
    %879 = vmatpush1.bf16.msra.mxu0 %v873
    %880 = vmatprep.subr.bf16.mxu0 0
    %881 = vmatpush1.bf16.msra.mxu0 0
    %882 = vmatprep.subr.bf16.mxu0 0
    %883 = vmatpush1.bf16.msra.mxu0 0
    %884 = vmatprep.subr.bf16.mxu0 0
    %885 = vmatpush1.bf16.msra.mxu0 0
    %886 = vmatprep.subr.bf16.mxu0 0
    %887 = vmatpush1.bf16.msra.mxu0 0
    %888 = vmatprep.subr.bf16.mxu0 0
    %889 = vmatpush1.bf16.msra.mxu0 0
    %890 = vmatprep.subr.bf16.mxu0 0
    %891 = vmatpush1.bf16.msra.mxu0 0
    %892 = vmatprep.subr.bf16.mxu0 0
    %893 = vmatpush1.bf16.msra.mxu0 0
    %894 = vmatprep.subr.bf16.mxu0 0
    %895 = vmatpush1.bf16.msra.mxu0 0
    %896 = vmatprep.subr.bf16.mxu0 0
    %897 = vmatpush1.bf16.msra.mxu0 0
    %898 = vmatprep.subr.bf16.mxu0 0
    %899 = vmatpush1.bf16.msra.mxu0 0
    %900 = vmatprep.subr.bf16.mxu0 0
    %901 = vmatpush1.bf16.msra.mxu0 0
    %902 = vmatprep.subr.bf16.mxu0 0
    %903 = vmatpush1.bf16.msra.mxu0 0
    %904 = vmatprep.subr.bf16.mxu0 0
    %905 = vmatpush1.bf16.msra.mxu0 0
    %906 = vmatprep.subr.bf16.mxu0 0
    %907 = vmatpush1.bf16.msra.mxu0 0
    %908 = vmatprep.mubr.bf16.mxu0 0
    %909 = vmatmul.mubr.bf16.gmra.mrb[0].mxu0 %v125
    %v910 = vpop.f32.mrb[0].mxu0
    %v911 = vadd.f32 0.0, %v910
    %v912 = vpop.f32.mrb[0].mxu0
    %v913 = vpop.f32.mrb[0].mxu0
    %v914 = vpop.f32.mrb[0].mxu0
    %915 = vdwg.mxu0
    %v916 = vadd.f32 %v858, %v911
    %v917 = vxor.u32 %v916, 2147483648
    %v918 = vmul.f32 %v917, 1.442695
    %v919 = vpow.pop %v918
    %v920 = vadd.f32 %v919, 1.0
    %v921 = vrcp.pop %v920
    %v922 = vmul.f32 1.0, %v921
    %v923 = vmul.f32 %v922, 2.0
    %v924 = vsub.f32 %v923, 1.0
    %v925 = vmul.f32 %v922, 0.0
    %927 = vrot.lane.b32.xlu0 %v924, 64
    %v928 = vpop.permute.xlu0 %927
    %v930 = vmul.f32 %v922, %v928
    %932 = vrot.lane.b32.xlu0 %v930, 32
    %v933 = vpop.permute.xlu0 %932
    %v935 = vadd.f32 %v925, %v933
    %v936 = vtanh.pop %v935
    %938 = vrot.lane.b32.xlu0 %v936, 64
    %v939 = vpop.permute.xlu0 %938
    %v941 = vmul.f32 %v922, %v939
    %v942 = vpack.c.bf16 %v941, %v941
    %944 = vrot.lane.b32.xlu0 %v942, 32
    %v945 = vpop.permute.xlu0 %944
    %v947 = vsel %vm123, %v945, 0
    %949 = vmatprep.subr.bf16.mxu0 0
    %950 = vmatpush1.bf16.msra.mxu0 %v872
    %951 = vmatprep.subr.bf16.mxu0 0
    %952 = vmatpush1.bf16.msra.mxu0 %v873
    %953 = vmatprep.subr.bf16.mxu0 0
    %954 = vmatpush1.bf16.msra.mxu0 0
    %955 = vmatprep.subr.bf16.mxu0 0
    %956 = vmatpush1.bf16.msra.mxu0 0
    %957 = vmatprep.subr.bf16.mxu0 0
    %958 = vmatpush1.bf16.msra.mxu0 0
    %959 = vmatprep.subr.bf16.mxu0 0
    %960 = vmatpush1.bf16.msra.mxu0 0
    %961 = vmatprep.subr.bf16.mxu0 0
    %962 = vmatpush1.bf16.msra.mxu0 0
    %963 = vmatprep.subr.bf16.mxu0 0
    %964 = vmatpush1.bf16.msra.mxu0 0
    %965 = vmatprep.subr.bf16.mxu0 0
    %966 = vmatpush1.bf16.msra.mxu0 0
    %967 = vmatprep.subr.bf16.mxu0 0
    %968 = vmatpush1.bf16.msra.mxu0 0
    %969 = vmatprep.subr.bf16.mxu0 0
    %970 = vmatpush1.bf16.msra.mxu0 0
    %971 = vmatprep.subr.bf16.mxu0 0
    %972 = vmatpush1.bf16.msra.mxu0 0
    %973 = vmatprep.subr.bf16.mxu0 0
    %974 = vmatpush1.bf16.msra.mxu0 0
    %975 = vmatprep.subr.bf16.mxu0 0
    %976 = vmatpush1.bf16.msra.mxu0 0
    %977 = vmatprep.subr.bf16.mxu0 0
    %978 = vmatpush1.bf16.msra.mxu0 0
    %979 = vmatprep.subr.bf16.mxu0 0
    %980 = vmatpush1.bf16.msra.mxu0 0
    %981 = vmatprep.mubr.bf16.mxu0 0
    %982 = vmatmul.mubr.bf16.gmra.mrb[0].mxu0 %v947
    %v983 = vpop.f32.mrb[0].mxu0
    %v984 = vadd.f32 0.0, %v983
    %v985 = vpop.f32.mrb[0].mxu0
    %v986 = vpop.f32.mrb[0].mxu0
    %v987 = vpop.f32.mrb[0].mxu0
    %988 = vdwg.mxu0
    %v990 = vrot.slane %v984, 6
    %v992 = vadd.f32 %v858, %v990
    %v993 = vxor.u32 %v992, 2147483648
    %v994 = vmul.f32 %v993, 1.442695
    %v995 = vpow.pop %v994
    %v996 = vadd.f32 %v995, 1.0
    %v997 = vrcp.pop %v996
    %v998 = vmul.f32 1.0, %v997
    %v999 = vmul.f32 %v998, 2.0
    %v1000 = vsub.f32 %v999, 1.0
    %v1002 = vrot.slane %v935, 6
    %v1004 = vmul.f32 %v998, %v1002
    %1006 = vrot.lane.b32.xlu0 %v1000, 64
    %v1007 = vpop.permute.xlu0 %1006
    %v1009 = vmul.f32 %v998, %v1007
    %1011 = vrot.lane.b32.xlu0 %v1009, 32
    %v1012 = vpop.permute.xlu0 %1011
    %v1014 = vadd.f32 %v1004, %v1012
    %v1015 = vtanh.pop %v1014
    %1017 = vrot.lane.b32.xlu0 %v1015, 64
    %v1018 = vpop.permute.xlu0 %1017
    %v1020 = vmul.f32 %v998, %v1018
    %v1021 = vpack.c.bf16 %v1020, %v1020
    %v1023 = vrot.slane %v1021, 1
    %1024 = vrot.lane.b32.xlu0 %v1023, 32
    %v1025 = vpop.permute.xlu0 %1024
    %v1027 = vsel %vm123, %v1025, 0
    %1029 = vmatprep.subr.bf16.mxu0 0
    %1030 = vmatpush1.bf16.msra.mxu0 %v872
    %1031 = vmatprep.subr.bf16.mxu0 0
    %1032 = vmatpush1.bf16.msra.mxu0 %v873
    %1033 = vmatprep.subr.bf16.mxu0 0
    %1034 = vmatpush1.bf16.msra.mxu0 0
    %1035 = vmatprep.subr.bf16.mxu0 0
    %1036 = vmatpush1.bf16.msra.mxu0 0
    %1037 = vmatprep.subr.bf16.mxu0 0
    %1038 = vmatpush1.bf16.msra.mxu0 0
    %1039 = vmatprep.subr.bf16.mxu0 0
    %1040 = vmatpush1.bf16.msra.mxu0 0
    %1041 = vmatprep.subr.bf16.mxu0 0
    %1042 = vmatpush1.bf16.msra.mxu0 0
    %1043 = vmatprep.subr.bf16.mxu0 0
    %1044 = vmatpush1.bf16.msra.mxu0 0
    %1045 = vmatprep.subr.bf16.mxu0 0
    %1046 = vmatpush1.bf16.msra.mxu0 0
    %1047 = vmatprep.subr.bf16.mxu0 0
    %1048 = vmatpush1.bf16.msra.mxu0 0
    %1049 = vmatprep.subr.bf16.mxu0 0
    %1050 = vmatpush1.bf16.msra.mxu0 0
    %1051 = vmatprep.subr.bf16.mxu0 0
    %1052 = vmatpush1.bf16.msra.mxu0 0
    %1053 = vmatprep.subr.bf16.mxu0 0
    %1054 = vmatpush1.bf16.msra.mxu0 0
    %1055 = vmatprep.subr.bf16.mxu0 0
    %1056 = vmatpush1.bf16.msra.mxu0 0
    %1057 = vmatprep.subr.bf16.mxu0 0
    %1058 = vmatpush1.bf16.msra.mxu0 0
    %1059 = vmatprep.subr.bf16.mxu0 0
    %1060 = vmatpush1.bf16.msra.mxu0 0
    %1061 = vmatprep.mubr.bf16.mxu0 0
    %1062 = vmatmul.mubr.bf16.gmra.mrb[0].mxu0 %v1027
    %v1063 = vpop.f32.mrb[0].mxu0
    %v1064 = vadd.f32 0.0, %v1063
    %v1065 = vpop.f32.mrb[0].mxu0
    %v1066 = vpop.f32.mrb[0].mxu0
    %v1067 = vpop.f32.mrb[0].mxu0
    %1068 = vdwg.mxu0
    %v1070 = vrot.slane %v1064, 4
    %v1072 = vadd.f32 %v858, %v1070
    %v1073 = vxor.u32 %v1072, 2147483648
    %v1074 = vmul.f32 %v1073, 1.442695
    %v1075 = vpow.pop %v1074
    %v1076 = vadd.f32 %v1075, 1.0
    %v1077 = vrcp.pop %v1076
    %v1078 = vmul.f32 1.0, %v1077
    %v1079 = vmul.f32 %v1078, 2.0
    %v1080 = vsub.f32 %v1079, 1.0
    %v1082 = vrot.slane %v1014, 6
    %v1084 = vmul.f32 %v1078, %v1082
    %1086 = vrot.lane.b32.xlu0 %v1080, 64
    %v1087 = vpop.permute.xlu0 %1086
    %v1089 = vmul.f32 %v1078, %v1087
    %1091 = vrot.lane.b32.xlu0 %v1089, 32
    %v1092 = vpop.permute.xlu0 %1091
    %v1094 = vadd.f32 %v1084, %v1092
    %v1095 = vtanh.pop %v1094
    %1097 = vrot.lane.b32.xlu0 %v1095, 64
    %v1098 = vpop.permute.xlu0 %1097
    %v1100 = vmul.f32 %v1078, %v1098
    %v1101 = vpack.c.bf16 %v1100, %v1100
    %v1103 = vrot.slane %v1101, 2
    %1104 = vrot.lane.b32.xlu0 %v1103, 32
    %v1105 = vpop.permute.xlu0 %1104
    %v1107 = vsel %vm123, %v1105, 0
    %1109 = vmatprep.subr.bf16.mxu0 0
    %1110 = vmatpush1.bf16.msra.mxu0 %v872
    %1111 = vmatprep.subr.bf16.mxu0 0
    %1112 = vmatpush1.bf16.msra.mxu0 %v873
    %1113 = vmatprep.subr.bf16.mxu0 0
    %1114 = vmatpush1.bf16.msra.mxu0 0
    %1115 = vmatprep.subr.bf16.mxu0 0
    %1116 = vmatpush1.bf16.msra.mxu0 0
    %1117 = vmatprep.subr.bf16.mxu0 0
    %1118 = vmatpush1.bf16.msra.mxu0 0
    %1119 = vmatprep.subr.bf16.mxu0 0
    %1120 = vmatpush1.bf16.msra.mxu0 0
    %1121 = vmatprep.subr.bf16.mxu0 0
    %1122 = vmatpush1.bf16.msra.mxu0 0
    %1123 = vmatprep.subr.bf16.mxu0 0
    %1124 = vmatpush1.bf16.msra.mxu0 0
    %1125 = vmatprep.subr.bf16.mxu0 0
    %1126 = vmatpush1.bf16.msra.mxu0 0
    %1127 = vmatprep.subr.bf16.mxu0 0
    %1128 = vmatpush1.bf16.msra.mxu0 0
    %1129 = vmatprep.subr.bf16.mxu0 0
    %1130 = vmatpush1.bf16.msra.mxu0 0
    %1131 = vmatprep.subr.bf16.mxu0 0
    %1132 = vmatpush1.bf16.msra.mxu0 0
    %1133 = vmatprep.subr.bf16.mxu0 0
    %1134 = vmatpush1.bf16.msra.mxu0 0
    %1135 = vmatprep.subr.bf16.mxu0 0
    %1136 = vmatpush1.bf16.msra.mxu0 0
    %1137 = vmatprep.subr.bf16.mxu0 0
    %1138 = vmatpush1.bf16.msra.mxu0 0
    %1139 = vmatprep.subr.bf16.mxu0 0
    %1140 = vmatpush1.bf16.msra.mxu0 0
    %1141 = vmatprep.mubr.bf16.mxu0 0
    %1142 = vmatmul.mubr.bf16.gmra.mrb[0].mxu0 %v1107
    %v1143 = vpop.f32.mrb[0].mxu0
    %v1144 = vadd.f32 0.0, %v1143
    %v1145 = vpop.f32.mrb[0].mxu0
    %v1146 = vpop.f32.mrb[0].mxu0
    %v1147 = vpop.f32.mrb[0].mxu0
    %1148 = vdwg.mxu0
    %v1150 = vrot.slane %v1144, 2
    %v1152 = vadd.f32 %v858, %v1150
    %v1153 = vxor.u32 %v1152, 2147483648
    %v1154 = vmul.f32 %v1153, 1.442695
    %v1155 = vpow.pop %v1154
    %v1156 = vadd.f32 %v1155, 1.0
    %v1157 = vrcp.pop %v1156
    %v1158 = vmul.f32 1.0, %v1157
    %v1159 = vmul.f32 %v1158, 2.0
    %v1160 = vsub.f32 %v1159, 1.0
    %v1162 = vrot.slane %v1094, 6
    %v1164 = vmul.f32 %v1158, %v1162
    %1166 = vrot.lane.b32.xlu0 %v1160, 64
    %v1167 = vpop.permute.xlu0 %1166
    %v1169 = vmul.f32 %v1158, %v1167
    %1171 = vrot.lane.b32.xlu0 %v1169, 32
    %v1172 = vpop.permute.xlu0 %1171
    %v1174 = vadd.f32 %v1164, %v1172
    %v1175 = vtanh.pop %v1174
    %1177 = vrot.lane.b32.xlu0 %v1175, 64
    %v1178 = vpop.permute.xlu0 %1177
    %v1180 = vmul.f32 %v1158, %v1178
    %v1181 = vpack.c.bf16 %v1180, %v1180
    %v1183 = vrot.slane %v1181, 3
    %1184 = vrot.lane.b32.xlu0 %v1183, 32
    %v1185 = vpop.permute.xlu0 %1184
    %v1187 = vsel %vm123, %v1185, 0
    %1189 = vmatprep.subr.bf16.mxu0 0
    %1190 = vmatpush1.bf16.msra.mxu0 %v872
    %1191 = vmatprep.subr.bf16.mxu0 0
    %1192 = vmatpush1.bf16.msra.mxu0 %v873
    %1193 = vmatprep.subr.bf16.mxu0 0
    %1194 = vmatpush1.bf16.msra.mxu0 0
    %1195 = vmatprep.subr.bf16.mxu0 0
    %1196 = vmatpush1.bf16.msra.mxu0 0
    %1197 = vmatprep.subr.bf16.mxu0 0
    %1198 = vmatpush1.bf16.msra.mxu0 0
    %1199 = vmatprep.subr.bf16.mxu0 0
    %1200 = vmatpush1.bf16.msra.mxu0 0
    %1201 = vmatprep.subr.bf16.mxu0 0
    %1202 = vmatpush1.bf16.msra.mxu0 0
    %1203 = vmatprep.subr.bf16.mxu0 0
    %1204 = vmatpush1.bf16.msra.mxu0 0
    %1205 = vmatprep.subr.bf16.mxu0 0
    %1206 = vmatpush1.bf16.msra.mxu0 0
    %1207 = vmatprep.subr.bf16.mxu0 0
    %1208 = vmatpush1.bf16.msra.mxu0 0
    %1209 = vmatprep.subr.bf16.mxu0 0
    %1210 = vmatpush1.bf16.msra.mxu0 0
    %1211 = vmatprep.subr.bf16.mxu0 0
    %1212 = vmatpush1.bf16.msra.mxu0 0
    %1213 = vmatprep.subr.bf16.mxu0 0
    %1214 = vmatpush1.bf16.msra.mxu0 0
    %1215 = vmatprep.subr.bf16.mxu0 0
    %1216 = vmatpush1.bf16.msra.mxu0 0
    %1217 = vmatprep.subr.bf16.mxu0 0
    %1218 = vmatpush1.bf16.msra.mxu0 0
    %1219 = vmatprep.subr.bf16.mxu0 0
    %1220 = vmatpush1.bf16.msra.mxu0 0
    %1221 = vmatprep.mubr.bf16.mxu0 0
    %1222 = vmatmul.mubr.bf16.gmra.mrb[0].mxu0 %v1187
    %v1223 = vpop.f32.mrb[0].mxu0
    %v1224 = vadd.f32 0.0, %v1223
    %v1225 = vpop.f32.mrb[0].mxu0
    %v1226 = vpop.f32.mrb[0].mxu0
    %v1227 = vpop.f32.mrb[0].mxu0
    %1228 = vdwg.mxu0
    %v1229 = vadd.f32 %v861, %v1224
    %v1230 = vxor.u32 %v1229, 2147483648
    %v1231 = vmul.f32 %v1230, 1.442695
    %v1232 = vpow.pop %v1231
    %v1233 = vadd.f32 %v1232, 1.0
    %v1234 = vrcp.pop %v1233
    %v1235 = vmul.f32 1.0, %v1234
    %v1236 = vmul.f32 %v1235, 2.0
    %v1237 = vsub.f32 %v1236, 1.0
    %v1239 = vrot.slane %v1174, 6
    %v1241 = vmul.f32 %v1235, %v1239
    %1243 = vrot.lane.b32.xlu0 %v1237, 64
    %v1244 = vpop.permute.xlu0 %1243
    %v1246 = vmul.f32 %v1235, %v1244
    %1248 = vrot.lane.b32.xlu0 %v1246, 32
    %v1249 = vpop.permute.xlu0 %1248
    %v1251 = vadd.f32 %v1241, %v1249
    %v1252 = vtanh.pop %v1251
    %1254 = vrot.lane.b32.xlu0 %v1252, 64
    %v1255 = vpop.permute.xlu0 %1254
    %v1257 = vmul.f32 %v1235, %v1255
    %v1258 = vpack.c.bf16 %v1257, %v1257
    %1260 = vrot.lane.b32.xlu0 %v1258, 32
    %v1261 = vpop.permute.xlu0 %1260
    %v1263 = vsel %vm123, %v1261, 0
    %1265 = vmatprep.subr.bf16.mxu0 0
    %1266 = vmatpush1.bf16.msra.mxu0 %v872
    %1267 = vmatprep.subr.bf16.mxu0 0
    %1268 = vmatpush1.bf16.msra.mxu0 %v873
    %1269 = vmatprep.subr.bf16.mxu0 0
    %1270 = vmatpush1.bf16.msra.mxu0 0
    %1271 = vmatprep.subr.bf16.mxu0 0
    %1272 = vmatpush1.bf16.msra.mxu0 0
    %1273 = vmatprep.subr.bf16.mxu0 0
    %1274 = vmatpush1.bf16.msra.mxu0 0
    %1275 = vmatprep.subr.bf16.mxu0 0
    %1276 = vmatpush1.bf16.msra.mxu0 0
    %1277 = vmatprep.subr.bf16.mxu0 0
    %1278 = vmatpush1.bf16.msra.mxu0 0
    %1279 = vmatprep.subr.bf16.mxu0 0
    %1280 = vmatpush1.bf16.msra.mxu0 0
    %1281 = vmatprep.subr.bf16.mxu0 0
    %1282 = vmatpush1.bf16.msra.mxu0 0
    %1283 = vmatprep.subr.bf16.mxu0 0
    %1284 = vmatpush1.bf16.msra.mxu0 0
    %1285 = vmatprep.subr.bf16.mxu0 0
    %1286 = vmatpush1.bf16.msra.mxu0 0
    %1287 = vmatprep.subr.bf16.mxu0 0
    %1288 = vmatpush1.bf16.msra.mxu0 0
    %1289 = vmatprep.subr.bf16.mxu0 0
    %1290 = vmatpush1.bf16.msra.mxu0 0
    %1291 = vmatprep.subr.bf16.mxu0 0
    %1292 = vmatpush1.bf16.msra.mxu0 0
    %1293 = vmatprep.subr.bf16.mxu0 0
    %1294 = vmatpush1.bf16.msra.mxu0 0
    %1295 = vmatprep.subr.bf16.mxu0 0
    %1296 = vmatpush1.bf16.msra.mxu0 0
    %1297 = vmatprep.mubr.bf16.mxu0 0
    %1298 = vmatmul.mubr.bf16.gmra.mrb[0].mxu0 %v1263
    %v1299 = vpop.f32.mrb[0].mxu0
    %v1300 = vadd.f32 0.0, %v1299
    %v1301 = vpop.f32.mrb[0].mxu0
    %v1302 = vpop.f32.mrb[0].mxu0
    %v1303 = vpop.f32.mrb[0].mxu0
    %1304 = vdwg.mxu0
    %v1306 = vrot.slane %v1300, 6
    %v1308 = vadd.f32 %v861, %v1306
    %v1309 = vxor.u32 %v1308, 2147483648
    %v1310 = vmul.f32 %v1309, 1.442695
    %v1311 = vpow.pop %v1310
    %v1312 = vadd.f32 %v1311, 1.0
    %v1313 = vrcp.pop %v1312
    %v1314 = vmul.f32 1.0, %v1313
    %v1315 = vmul.f32 %v1314, 2.0
    %v1316 = vsub.f32 %v1315, 1.0
    %v1318 = vrot.slane %v1251, 6
    %v1320 = vmul.f32 %v1314, %v1318
    %1322 = vrot.lane.b32.xlu0 %v1316, 64
    %v1323 = vpop.permute.xlu0 %1322
    %v1325 = vmul.f32 %v1314, %v1323
    %1327 = vrot.lane.b32.xlu0 %v1325, 32
    %v1328 = vpop.permute.xlu0 %1327
    %v1330 = vadd.f32 %v1320, %v1328
    %v1331 = vtanh.pop %v1330
    %1333 = vrot.lane.b32.xlu0 %v1331, 64
    %v1334 = vpop.permute.xlu0 %1333
    %v1336 = vmul.f32 %v1314, %v1334
    %v1337 = vpack.c.bf16 %v1336, %v1336
    %v1339 = vrot.slane %v1337, 1
    %1340 = vrot.lane.b32.xlu0 %v1339, 32
    %v1341 = vpop.permute.xlu0 %1340
    %v1343 = vsel %vm123, %v1341, 0
    %1345 = vmatprep.subr.bf16.mxu0 0
    %1346 = vmatpush1.bf16.msra.mxu0 %v872
    %1347 = vmatprep.subr.bf16.mxu0 0
    %1348 = vmatpush1.bf16.msra.mxu0 %v873
    %1349 = vmatprep.subr.bf16.mxu0 0
    %1350 = vmatpush1.bf16.msra.mxu0 0
    %1351 = vmatprep.subr.bf16.mxu0 0
    %1352 = vmatpush1.bf16.msra.mxu0 0
    %1353 = vmatprep.subr.bf16.mxu0 0
    %1354 = vmatpush1.bf16.msra.mxu0 0
    %1355 = vmatprep.subr.bf16.mxu0 0
    %1356 = vmatpush1.bf16.msra.mxu0 0
    %1357 = vmatprep.subr.bf16.mxu0 0
    %1358 = vmatpush1.bf16.msra.mxu0 0
    %1359 = vmatprep.subr.bf16.mxu0 0
    %1360 = vmatpush1.bf16.msra.mxu0 0
    %1361 = vmatprep.subr.bf16.mxu0 0
    %1362 = vmatpush1.bf16.msra.mxu0 0
    %1363 = vmatprep.subr.bf16.mxu0 0
    %1364 = vmatpush1.bf16.msra.mxu0 0
    %1365 = vmatprep.subr.bf16.mxu0 0
    %1366 = vmatpush1.bf16.msra.mxu0 0
    %1367 = vmatprep.subr.bf16.mxu0 0
    %1368 = vmatpush1.bf16.msra.mxu0 0
    %1369 = vmatprep.subr.bf16.mxu0 0
    %1370 = vmatpush1.bf16.msra.mxu0 0
    %1371 = vmatprep.subr.bf16.mxu0 0
    %1372 = vmatpush1.bf16.msra.mxu0 0
    %1373 = vmatprep.subr.bf16.mxu0 0
    %1374 = vmatpush1.bf16.msra.mxu0 0
    %1375 = vmatprep.subr.bf16.mxu0 0
    %1376 = vmatpush1.bf16.msra.mxu0 0
    %1377 = vmatprep.mubr.bf16.mxu0 0
    %1378 = vmatmul.mubr.bf16.gmra.mrb[0].mxu0 %v1343
    %v1379 = vpop.f32.mrb[0].mxu0
    %v1380 = vadd.f32 0.0, %v1379
    %v1381 = vpop.f32.mrb[0].mxu0
    %v1382 = vpop.f32.mrb[0].mxu0
    %v1383 = vpop.f32.mrb[0].mxu0
    %1384 = vdwg.mxu0
    %v1386 = vrot.slane %v1380, 4
    %v1388 = vadd.f32 %v861, %v1386
    %v1389 = vxor.u32 %v1388, 2147483648
    %v1390 = vmul.f32 %v1389, 1.442695
    %v1391 = vpow.pop %v1390
    %v1392 = vadd.f32 %v1391, 1.0
    %v1393 = vrcp.pop %v1392
    %v1394 = vmul.f32 1.0, %v1393
    %v1395 = vmul.f32 %v1394, 2.0
    %v1396 = vsub.f32 %v1395, 1.0
    %v1398 = vrot.slane %v1330, 6
    %v1400 = vmul.f32 %v1394, %v1398
    %1402 = vrot.lane.b32.xlu0 %v1396, 64
    %v1403 = vpop.permute.xlu0 %1402
    %v1405 = vmul.f32 %v1394, %v1403
    %1407 = vrot.lane.b32.xlu0 %v1405, 32
    %v1408 = vpop.permute.xlu0 %1407
    %v1410 = vadd.f32 %v1400, %v1408
    %v1411 = vtanh.pop %v1410
    %1413 = vrot.lane.b32.xlu0 %v1411, 64
    %v1414 = vpop.permute.xlu0 %1413
    %v1416 = vmul.f32 %v1394, %v1414
    %v1417 = vpack.c.bf16 %v1416, %v1416
    %v1419 = vrot.slane %v1417, 2
    %1420 = vrot.lane.b32.xlu0 %v1419, 32
    %v1421 = vpop.permute.xlu0 %1420
    %v1423 = vsel %vm123, %v1421, 0
    %1425 = vmatprep.subr.bf16.mxu0 0
    %1426 = vmatpush1.bf16.msra.mxu0 %v872
    %1427 = vmatprep.subr.bf16.mxu0 0
    %1428 = vmatpush1.bf16.msra.mxu0 %v873
    %1429 = vmatprep.subr.bf16.mxu0 0
    %1430 = vmatpush1.bf16.msra.mxu0 0
    %1431 = vmatprep.subr.bf16.mxu0 0
    %1432 = vmatpush1.bf16.msra.mxu0 0
    %1433 = vmatprep.subr.bf16.mxu0 0
    %1434 = vmatpush1.bf16.msra.mxu0 0
    %1435 = vmatprep.subr.bf16.mxu0 0
    %1436 = vmatpush1.bf16.msra.mxu0 0
    %1437 = vmatprep.subr.bf16.mxu0 0
    %1438 = vmatpush1.bf16.msra.mxu0 0
    %1439 = vmatprep.subr.bf16.mxu0 0
    %1440 = vmatpush1.bf16.msra.mxu0 0
    %1441 = vmatprep.subr.bf16.mxu0 0
    %1442 = vmatpush1.bf16.msra.mxu0 0
    %1443 = vmatprep.subr.bf16.mxu0 0
    %1444 = vmatpush1.bf16.msra.mxu0 0
    %1445 = vmatprep.subr.bf16.mxu0 0
    %1446 = vmatpush1.bf16.msra.mxu0 0
    %1447 = vmatprep.subr.bf16.mxu0 0
    %1448 = vmatpush1.bf16.msra.mxu0 0
    %1449 = vmatprep.subr.bf16.mxu0 0
    %1450 = vmatpush1.bf16.msra.mxu0 0
    %1451 = vmatprep.subr.bf16.mxu0 0
    %1452 = vmatpush1.bf16.msra.mxu0 0
    %1453 = vmatprep.subr.bf16.mxu0 0
    %1454 = vmatpush1.bf16.msra.mxu0 0
    %1455 = vmatprep.subr.bf16.mxu0 0
    %1456 = vmatpush1.bf16.msra.mxu0 0
    %1457 = vmatprep.mubr.bf16.mxu0 0
    %1458 = vmatmul.mubr.bf16.gmra.mrb[0].mxu0 %v1423
    %v1459 = vpop.f32.mrb[0].mxu0
    %v1460 = vadd.f32 0.0, %v1459
    %v1461 = vpop.f32.mrb[0].mxu0
    %v1462 = vpop.f32.mrb[0].mxu0
    %v1463 = vpop.f32.mrb[0].mxu0
    %1464 = vdwg.mxu0
    %v1466 = vrot.slane %v1460, 2
    %v1468 = vadd.f32 %v861, %v1466
    %v1469 = vxor.u32 %v1468, 2147483648
    %v1470 = vmul.f32 %v1469, 1.442695
    %v1471 = vpow.pop %v1470
    %v1472 = vadd.f32 %v1471, 1.0
    %v1473 = vrcp.pop %v1472
    %v1474 = vmul.f32 1.0, %v1473
    %v1475 = vmul.f32 %v1474, 2.0
    %v1476 = vsub.f32 %v1475, 1.0
    %v1478 = vrot.slane %v1410, 6
    %v1480 = vmul.f32 %v1474, %v1478
    %1482 = vrot.lane.b32.xlu0 %v1476, 64
    %v1483 = vpop.permute.xlu0 %1482
    %v1485 = vmul.f32 %v1474, %v1483
    %1487 = vrot.lane.b32.xlu0 %v1485, 32
    %v1488 = vpop.permute.xlu0 %1487
    %v1490 = vadd.f32 %v1480, %v1488
    %v1491 = vtanh.pop %v1490
    %1493 = vrot.lane.b32.xlu0 %v1491, 64
    %v1494 = vpop.permute.xlu0 %1493
    %v1496 = vmul.f32 %v1474, %v1494
    %1498 = vrot.lane.b32.xlu0 %v1496, 32
    %v1499 = vpop.permute.xlu0 %1498
    %vm1501 = vcmask 261126
    %v1502 = vsel %vm1501, %v1499, 0.0
    %1503 = vadd.xlane.f32.xlu0 %v1502
    %v1504 = vpop.xlane.xlu0 %1503
    %v1505 = vrcp.pop 32.0
    %v1506 = vmul.f32 %v1504, %v1505
    %v1507 = vsub.f32 %v1496, %v1506
    %v1508 = vmul.f32 %v1507, %v1507
    %1510 = vrot.lane.b32.xlu0 %v1508, 32
    %v1511 = vpop.permute.xlu0 %1510
    %v1513 = vsel %vm1501, %v1511, 0.0
    %1514 = vadd.xlane.f32.xlu0 %v1513
    %v1515 = vpop.xlane.xlu0 %1514
    %v1516 = vmul.f32 %v1515, %v1505
    %v1517 = vadd.f32 %v1516, 1e-05
    %v1518 = vrsqrt.pop %v1517
    %v1519 = vmul.f32 %v1507, %v1518
    %v1520 = vld [vmem:[%s7] sm:$0x1]
    %v1522 = vlaneseq
    %v1523 = vshrl.u32 %v1522, 7
    %v1524 = vsub.s32 0, %v1523
    %v1525 = vrot.slane %v1520, %v1524
    %1526 = vrot.lane.b32.xlu0 %v1525, 96
    %v1527 = vpop.permute.xlu0 %1526
    %v1529 = vmul.f32 %v1519, %v1527
    %v1530 = vld [vmem:[%s8] sm:$0x1]
    %v1532 = vlaneseq
    %v1533 = vshrl.u32 %v1532, 7
    %v1534 = vsub.s32 0, %v1533
    %v1535 = vrot.slane %v1530, %v1534
    %1536 = vrot.lane.b32.xlu0 %v1535, 96
    %v1537 = vpop.permute.xlu0 %1536
    %v1539 = vadd.f32 %v1529, %v1537
    %v1540 = vld [vmem:[%s9] sm:$0xff]
    %v1541 = vld [vmem:[%s9 + $0x8] sm:$0xff]
    %v1542 = vld [vmem:[%s9 + $0x10] sm:$0xff]
    %v1543 = vld [vmem:[%s9 + $0x18] sm:$0xff]
    %v1544 = vld [vmem:[%s10] sm:$0x1]
    %v1546 = vlaneseq
    %v1547 = vshrl.u32 %v1546, 7
    %v1548 = vsub.s32 0, %v1547
    %v1549 = vrot.slane %v1544, %v1548
    %v1552 = vrot.slane %v1539, 6
    %1553 = vrot.lane.b32.xlu0 %v1552, 32
    %v1554 = vpop.permute.xlu0 %1553
    %v1555 = vsel %vm123, %v1554, 0
    %1557 = vmatprep.subr.mxu0 0.0
    %1558 = vmatpush1.msra.mxu0 %v1540
    %1559 = vmatprep.subr.mxu0 0.0
    %1560 = vmatpush1.msra.mxu0 %v1541
    %1561 = vmatprep.subr.mxu0 0.0
    %1562 = vmatpush1.msra.mxu0 %v1542
    %1563 = vmatprep.subr.mxu0 0.0
    %1564 = vmatpush1.msra.mxu0 %v1543
    %1565 = vmatprep.subr.mxu0 0.0
    %1566 = vmatpush1.msra.mxu0 0.0
    %1567 = vmatprep.subr.mxu0 0.0
    %1568 = vmatpush1.msra.mxu0 0.0
    %1569 = vmatprep.subr.mxu0 0.0
    %1570 = vmatpush1.msra.mxu0 0.0
    %1571 = vmatprep.subr.mxu0 0.0
    %1572 = vmatpush1.msra.mxu0 0.0
    %1573 = vmatprep.subr.mxu0 0.0
    %1574 = vmatpush1.msra.mxu0 0.0
    %1575 = vmatprep.subr.mxu0 0.0
    %1576 = vmatpush1.msra.mxu0 0.0
    %1577 = vmatprep.subr.mxu0 0.0
    %1578 = vmatpush1.msra.mxu0 0.0
    %1579 = vmatprep.subr.mxu0 0.0
    %1580 = vmatpush1.msra.mxu0 0.0
    %1581 = vmatprep.subr.mxu0 0.0
    %1582 = vmatpush1.msra.mxu0 0.0
    %1583 = vmatprep.subr.mxu0 0.0
    %1584 = vmatpush1.msra.mxu0 0.0
    %1585 = vmatprep.subr.mxu0 0.0
    %1586 = vmatpush1.msra.mxu0 0.0
    %1587 = vmatprep.subr.mxu0 0.0
    %1588 = vmatpush1.msra.mxu0 0.0
    %1589 = vmatprep.subr.mxu0 0.0
    %1590 = vmatpush1.msra.mxu0 0.0
    %1591 = vmatprep.subr.mxu0 0.0
    %1592 = vmatpush1.msra.mxu0 0.0
    %1593 = vmatprep.subr.mxu0 0.0
    %1594 = vmatpush1.msra.mxu0 0.0
    %1595 = vmatprep.subr.mxu0 0.0
    %1596 = vmatpush1.msra.mxu0 0.0
    %1597 = vmatprep.subr.mxu0 0.0
    %1598 = vmatpush1.msra.mxu0 0.0
    %1599 = vmatprep.subr.mxu0 0.0
    %1600 = vmatpush1.msra.mxu0 0.0
    %1601 = vmatprep.subr.mxu0 0.0
    %1602 = vmatpush1.msra.mxu0 0.0
    %1603 = vmatprep.subr.mxu0 0.0
    %1604 = vmatpush1.msra.mxu0 0.0
    %1605 = vmatprep.subr.mxu0 0.0
    %1606 = vmatpush1.msra.mxu0 0.0
    %1607 = vmatprep.subr.mxu0 0.0
    %1608 = vmatpush1.msra.mxu0 0.0
    %1609 = vmatprep.subr.mxu0 0.0
    %1610 = vmatpush1.msra.mxu0 0.0
    %1611 = vmatprep.subr.mxu0 0.0
    %1612 = vmatpush1.msra.mxu0 0.0
    %1613 = vmatprep.subr.mxu0 0.0
    %1614 = vmatpush1.msra.mxu0 0.0
    %1615 = vmatprep.subr.mxu0 0.0
    %1616 = vmatpush1.msra.mxu0 0.0
    %1617 = vmatprep.subr.mxu0 0.0
    %1618 = vmatpush1.msra.mxu0 0.0
    %1619 = vmatprep.subr.mxu0 0.0
    %1620 = vmatpush1.msra.mxu0 0.0
    %1621 = vmatprep.mubr.f32.mxu0 0.0
    %1622 = vmatmul.mubr.f32.gmra.mrb[0].mxu0 %v1555
    %v1623 = vpop.f32.mrb[0].mxu0
    %v1624 = vadd.f32 %v1549, %v1623
    %v1625 = vpop.f32.mrb[0].mxu0
    %1626 = vdwg.mxu0
    %vm1627 = vcmask 25600
    %1628 = vst.msk [vmem:[#allocation3] sm:$0x3] %vm1627, %v1624
    // Predicated region
    $region46: #{lstm_model_forward.1} parent=1 // pred_check
      _
    $region47: #{lstm_model_forward.1} parent=1 // pred_check_branch
      %1630 = sbr.rel (0) target = $region49
    $region48: #{lstm_model_forward.1} parent=1 // pred_region
      %s1632 = ssub.s32 32, 32
      %1633 = vsyncadd [#allocation4], %s1632
      %s1635 = sshll.u32 [#allocation3], 4
      %s1636 = int_to_ptr.vmem [resolvable:$true] %s1635
      %1638 = dma.vmem_to_hbm [thread:$0]  %s1636, 32, %s11, [#allocation4]
    $region49: #{lstm_model_forward.1} parent=1 // pred_fallthru
      _
    // Predicated region
    $region50: #{lstm_model_forward.1} parent=1 // pred_check
      _
    $region51: #{lstm_model_forward.1} parent=1 // pred_check_branch
      %1640 = sbr.rel (0) target = $region53
    $region52: #{lstm_model_forward.1} parent=1 // pred_region
      %1641 = dma.done [#allocation4], 32
    $region53: #{lstm_model_forward.1} parent=1 // pred_fallthru
      _
    %1642 = vsyncpa [#allocation4], 1

</llo_original>
